<compile_context>
chip_gen: v7x
topology: tpu7x:2x2x1
jax: 0.10.0
libtpu: 0.0.40
codegen_flags: <defaults>
</compile_context>

<pallas_src>
import functools

import jax
import jax.numpy as jnp
from jax import lax
from jax.experimental import pallas as pl
from jax.experimental.pallas import tpu as pltpu

EPS = 1e-5  # nn.InstanceNorm2d default


def _decoder_block_kernel(xc_ref, w_ref, o_ref, sum_ref, ssq_ref, *, TH, W, H, Cout):
    # xc_ref : (TH+2, W+2, Cin) bf16  input row-chunk incl. 1-px zero halo
    # w_ref  : (9*Cin, 4*Cout) bf16   merged sub-pixel-phase weights
    # o_ref  : (TH*W, 4*Cout)  f32    phase-packed output, row = i*W + j,
    #                                 col = (a*2 + b)*Cout + o
    # sum_ref, ssq_ref : (1, 4*Cout) f32 VMEM scratch (persist across grid steps)
    p = pl.program_id(1)   # 0: stats pass, 1: normalize/write pass
    c = pl.program_id(2)   # row-chunk index
    Cin = xc_ref.shape[2]

    @pl.when(jnp.logical_and(p == 0, c == 0))
    def _init_stats():
        sum_ref[...] = jnp.zeros_like(sum_ref)
        ssq_ref[...] = jnp.zeros_like(ssq_ref)

    # 9-tap patch of the ORIGINAL-resolution chunk; one lane-dense MXU matmul
    # computes all 4 sub-pixel output phases at once.
    parts = [xc_ref[r:r + TH, d:d + W, :] for r in range(3) for d in range(3)]
    patch = jnp.concatenate(parts, axis=-1).reshape(TH * W, 9 * Cin)   # bf16
    y = jnp.dot(patch, w_ref[...], preferred_element_type=jnp.float32)  # f32

    @pl.when(p == 0)
    def _accumulate():
        sum_ref[...] += jnp.sum(y, axis=0, keepdims=True)
        ssq_ref[...] += jnp.sum(y * y, axis=0, keepdims=True)

    @pl.when(p == 1)
    def _normalize():
        # Fold phase-packed stats (1, 4*Cout) -> per-channel (1, Cout).
        s_all = sum_ref[...]
        q_all = ssq_ref[...]
        s = (s_all[:, 0:Cout] + s_all[:, Cout:2 * Cout]
             + s_all[:, 2 * Cout:3 * Cout] + s_all[:, 3 * Cout:4 * Cout])
        q = (q_all[:, 0:Cout] + q_all[:, Cout:2 * Cout]
             + q_all[:, 2 * Cout:3 * Cout] + q_all[:, 3 * Cout:4 * Cout])
        inv_n = 1.0 / (4.0 * H * W)                 # (2H)*(2W) output pixels
        mean = s * inv_n
        var = jnp.maximum(q * inv_n - mean * mean, 0.0)   # clamp cancellation
        rstd = lax.rsqrt(var + EPS)
        mean4 = jnp.tile(mean, (1, 4))              # back to phase-packed layout
        rstd4 = jnp.tile(rstd, (1, 4))
        o_ref[...] = jnp.maximum((y - mean4) * rstd4, 0.0).astype(o_ref.dtype)


def _merged_phase_weights(weight_oihw):
    """(Cout, Cin, 3, 3) -> (9*Cin, 4*Cout) merged sub-pixel-phase weights.

    Row index (r*3 + d)*Cin + cin == 3x3 tap at original-image offset (r-1, d-1);
    col index (a*2 + b)*Cout + o  == output parity phase (a, b), channel o.
    B[a, r, ky] marks which upsampled-conv tap ky folds onto original offset
    r-1 for output row parity a (same matrix for columns).
    """
    Cout, Cin, _, _ = weight_oihw.shape
    B = jnp.array([[[1., 0., 0.],
                    [0., 1., 1.],
                    [0., 0., 0.]],
                   [[0., 0., 0.],
                    [1., 1., 0.],
                    [0., 0., 1.]]], dtype=jnp.float32)
    comb = jnp.einsum("ary,bdx,oiyx->rdiabo", B, B, weight_oihw)
    return comb.reshape(9 * Cin, 4 * Cout)


def _pick_chunk_rows(H, W, Cin, Cout, budget_bytes=4 << 20):
    """Largest row-chunk whose per-step working set fits a small VMEM budget."""
    valid = [th for th in range(1, H + 1) if H % th == 0 and (th * W) % 8 == 0]
    assert valid, "need a chunk size with (rows * W) % 8 == 0"

    def per_step(th):
        return ((th + 2) * (W + 2) * Cin * 2      # bf16 input block
                + th * W * 9 * Cin * 2            # bf16 patch temporary
                + 2 * th * W * 4 * Cout * 4)      # f32 y + output block
    fitting = [th for th in valid if per_step(th) <= budget_bytes]
    return max(fitting) if fitting else min(valid)


def decoder_block(x_nchw, weight_oihw, bias=None, *, chunk_rows=None,
                  matmul_dtype=jnp.bfloat16):
    """Forward of DecoderBlock.

    x_nchw:      (N, Cin, H, W)    float32
    weight_oihw: (Cout, Cin, 3, 3) float32 (PyTorch Conv2d OIHW layout)
    bias:        (Cout,)           accepted for API parity; a per-channel bias
                                   is exactly cancelled by InstanceNorm.
    returns:     (N, Cout, 2H, 2W) float32
    """
    del bias  # mathematically irrelevant after InstanceNorm (mean subtraction)
    N, Cin, H, W = x_nchw.shape
    Cout = weight_oihw.shape[0]

    TH = chunk_rows if chunk_rows is not None else _pick_chunk_rows(H, W, Cin, Cout)
    assert H % TH == 0 and (TH * W) % 8 == 0, (H, W, TH)
    C = H // TH                                   # row chunks per batch item

    # Original-resolution NHWC input: zero-pad the halo and pre-chunk it (each
    # chunk carries its 1-row halo) so every grid step is a plain BlockSpec DMA.
    # The 2x nearest upsample is never materialized anywhere.
    x_nhwc = jnp.transpose(x_nchw, (0, 2, 3, 1)).astype(matmul_dtype)
    x_pad = jnp.pad(x_nhwc, ((0, 0), (1, 1), (1, 1), (0, 0)))
    xc = jnp.stack([x_pad[:, c * TH:c * TH + TH + 2] for c in range(C)], axis=1)
    # xc: (N, C, TH+2, W+2, Cin)

    wm = _merged_phase_weights(weight_oihw.astype(jnp.float32)).astype(matmul_dtype)

    # VMEM budget derived from actual block sizes; capped at 48 MiB so the same
    # kernel is safe on v7x (64 MiB physical).  Raise toward ~96 MiB on v5e/v6e
    # together with a larger chunk_rows if desired.
    esize = jnp.dtype(matmul_dtype).itemsize
    in_blk = (TH + 2) * (W + 2) * Cin * esize
    out_blk = TH * W * 4 * Cout * 4
    tmp = TH * W * 9 * Cin * esize + TH * W * 4 * Cout * 4
    vmem_limit = int(min(max(4 * (in_blk + out_blk) + 2 * tmp, 16 << 20), 48 << 20))

    flops = 2 * N * 2 * H * W * (9 * Cin) * (4 * Cout)         # 2 passes (recompute)
    bytes_accessed = (2 * N * C * (TH + 2) * (W + 2) * Cin * esize
                      + 9 * Cin * 4 * Cout * esize
                      + N * H * W * 4 * Cout * 4)

    kernel = functools.partial(_decoder_block_kernel, TH=TH, W=W, H=H, Cout=Cout)

    packed = pl.pallas_call(
        kernel,
        out_shape=jax.ShapeDtypeStruct((N, H * W, 4 * Cout), jnp.float32),
        grid_spec=pltpu.PrefetchScalarGridSpec(
            num_scalar_prefetch=0,
            grid=(N, 2, C),                       # (batch, pass, row-chunk)
            in_specs=[
                pl.BlockSpec((None, None, TH + 2, W + 2, Cin),
                             lambda n, p, c: (n, c, 0, 0, 0)),
                pl.BlockSpec((9 * Cin, 4 * Cout), lambda n, p, c: (0, 0)),
            ],
            # Pass 0 parks the output block on chunk 0 (never written by the
            # kernel there); pass 1 fully rewrites every chunk, so the final
            # writeback of each block always carries real data.
            out_specs=pl.BlockSpec((None, TH * W, 4 * Cout),
                                   lambda n, p, c: (n, c * p, 0)),
            scratch_shapes=[pltpu.VMEM((1, 4 * Cout), jnp.float32),
                            pltpu.VMEM((1, 4 * Cout), jnp.float32)],
        ),
        compiler_params=pltpu.CompilerParams(
            dimension_semantics=("parallel", "arbitrary", "arbitrary"),
            vmem_limit_bytes=vmem_limit,
        ),
        cost_estimate=pl.CostEstimate(
            flops=flops,
            transcendentals=N * C * Cout,
            bytes_accessed=bytes_accessed),
    )(xc, wm)

    # Unpack: row = i*W + j, col = (a*2 + b)*Cout + o  ->  NCHW (n, o, 2i+a, 2j+b).
    # One fused XLA transpose does the phase interleave AND NHWC->NCHW.
    t = packed.reshape(N, H, W, 2, 2, Cout)
    t = jnp.transpose(t, (0, 5, 1, 3, 2, 4))
    return t.reshape(N, Cout, 2 * H, 2 * W)


def decoder_block_reference(x_nchw, weight_oihw, bias):
    """Pure-JAX f32 reference mirroring the PyTorch forward (for validation)."""
    x = jnp.repeat(jnp.repeat(x_nchw, 2, axis=2), 2, axis=3)  # nearest upsample
    y = lax.conv_general_dilated(
        x, weight_oihw, window_strides=(1, 1), padding=((1, 1), (1, 1)),
        dimension_numbers=("NCHW", "OIHW", "NCHW"))
    y = y + bias[None, :, None, None]
    mean = jnp.mean(y, axis=(2, 3), keepdims=True)
    var = jnp.mean((y - mean) ** 2, axis=(2, 3), keepdims=True)
    y = (y - mean) * lax.rsqrt(var + EPS)
    return jnp.maximum(y, 0.0)


if __name__ == "__main__":
    key = jax.random.PRNGKey(0)
    k_x, k_w, k_b = jax.random.split(key, 3)

    N, Cin, Cout, H, W = 2, 4, 8, 16, 16

    x = jax.random.normal(k_x, (N, Cin, H, W), dtype=jnp.float32)
    fan_in = Cin * 3 * 3
    bound = 1.0 / (fan_in ** 0.5)
    weight = jax.random.uniform(k_w, (Cout, Cin, 3, 3), jnp.float32, -bound, bound)
    bias = jax.random.uniform(k_b, (Cout,), jnp.float32, -bound, bound)

    # chunk_rows=8 -> 2 row chunks x 2 passes per batch item, exercising the
    # spatial-tiling + two-pass InstanceNorm path even at this small test size.
    out = decoder_block(x, weight, bias, chunk_rows=8)
    out = jax.block_until_ready(out)

    ref = jax.block_until_ready(decoder_block_reference(x, weight, bias))
    assert out.shape == (N, Cout, 2 * H, 2 * W), out.shape
    # bf16 MXU operands (f32 accumulation) -> tolerance relaxed vs. f32 reference.
    max_err = float(jnp.max(jnp.abs(out - ref)))
    assert jnp.allclose(out, ref, atol=5e-2, rtol=5e-2), max_err

    print("KERNEL_OK")
</pallas_src>

<mosaic_0001>
module attributes {stable_mosaic.version = 11 : i64} {
  func.func @_decoder_block_kernel(%arg0: i32, %arg1: i32, %arg2: i32, %arg3: memref<1x1x10x18x4xbf16, #tpu.memory_space<vmem>>, %arg4: memref<36x32xbf16, #tpu.memory_space<vmem>>, %arg5: memref<1x128x32xf32, #tpu.memory_space<vmem>>, %arg6: memref<1x32xf32, #tpu.memory_space<vmem>>, %arg7: memref<1x32xf32, #tpu.memory_space<vmem>>) attributes {dimension_semantics = [#tpu.dimension_semantics<parallel>, #tpu.dimension_semantics<arbitrary>, #tpu.dimension_semantics<arbitrary>], iteration_bounds = array<i64: 2, 2, 2>, scalar_prefetch = 0 : i64, scratch_operands = 2 : i64, tpu.core_type = #tpu.core_type<tc>, window_params = [{transform_indices = @transform_0, window_bounds = array<i64: 1, 1, 10, 18, 4>}, {pipeline_mode = #tpu.pipeline_mode<synchronous>, transform_indices = @transform_1, window_bounds = array<i64: 36, 32>}, {transform_indices = @transform_2, window_bounds = array<i64: 1, 128, 32>}]} {
    %c0_i32 = arith.constant 0 : i32
    %0 = arith.cmpi eq, %arg1, %c0_i32 : i32
    %c0_i32_0 = arith.constant 0 : i32
    %1 = arith.cmpi eq, %arg2, %c0_i32_0 : i32
    %2 = arith.andi %0, %1 : i1
    %3 = arith.extui %2 : i1 to i32
    %c0_i32_1 = arith.constant 0 : i32
    %4 = arith.cmpi ne, %3, %c0_i32_1 : i32
    scf.if %4 {
      %cst_49 = arith.constant 0.000000e+00 : f32
      %33 = vector.broadcast %cst_49 : f32 to vector<1x32xf32>
      %c0_50 = arith.constant 0 : index
      %c0_51 = arith.constant 0 : index
      %34 = vector.load %arg6[%c0_50, %c0_51] : memref<1x32xf32, #tpu.memory_space<vmem>>, vector<1x32xf32>
      tpu.vector_store %arg6[%c0_50, %c0_51], %33 {strides = array<i32>} : memref<1x32xf32, #tpu.memory_space<vmem>>, vector<1x32xf32>,
      %cst_52 = arith.constant 0.000000e+00 : f32
      %35 = vector.broadcast %cst_52 : f32 to vector<1x32xf32>
      %c0_53 = arith.constant 0 : index
      %c0_54 = arith.constant 0 : index
      %36 = vector.load %arg7[%c0_53, %c0_54] : memref<1x32xf32, #tpu.memory_space<vmem>>, vector<1x32xf32>
      tpu.vector_store %arg7[%c0_53, %c0_54], %35 {strides = array<i32>} : memref<1x32xf32, #tpu.memory_space<vmem>>, vector<1x32xf32>,
    } else {
    }
    %c0 = arith.constant 0 : index
    %c0_2 = arith.constant 0 : index
    %c0_3 = arith.constant 0 : index
    %c0_4 = arith.constant 0 : index
    %c0_5 = arith.constant 0 : index
    %5 = vector.load %arg3[%c0, %c0_2, %c0_3, %c0_4, %c0_5] : memref<1x1x10x18x4xbf16, #tpu.memory_space<vmem>>, vector<1x1x8x16x4xbf16>
    %6 = vector.shape_cast %5 : vector<1x1x8x16x4xbf16> to vector<8x16x4xbf16>
    %c0_6 = arith.constant 0 : index
    %c0_7 = arith.constant 0 : index
    %c0_8 = arith.constant 0 : index
    %c1 = arith.constant 1 : index
    %c0_9 = arith.constant 0 : index
    %7 = vector.load %arg3[%c0_6, %c0_7, %c0_8, %c1, %c0_9] : memref<1x1x10x18x4xbf16, #tpu.memory_space<vmem>>, vector<1x1x8x16x4xbf16>
    %8 = vector.shape_cast %7 : vector<1x1x8x16x4xbf16> to vector<8x16x4xbf16>
    %c0_10 = arith.constant 0 : index
    %c0_11 = arith.constant 0 : index
    %c0_12 = arith.constant 0 : index
    %c2 = arith.constant 2 : index
    %c0_13 = arith.constant 0 : index
    %9 = vector.load %arg3[%c0_10, %c0_11, %c0_12, %c2, %c0_13] : memref<1x1x10x18x4xbf16, #tpu.memory_space<vmem>>, vector<1x1x8x16x4xbf16>
    %10 = vector.shape_cast %9 : vector<1x1x8x16x4xbf16> to vector<8x16x4xbf16>
    %c0_14 = arith.constant 0 : index
    %c0_15 = arith.constant 0 : index
    %c1_16 = arith.constant 1 : index
    %c0_17 = arith.constant 0 : index
    %c0_18 = arith.constant 0 : index
    %11 = vector.load %arg3[%c0_14, %c0_15, %c1_16, %c0_17, %c0_18] : memref<1x1x10x18x4xbf16, #tpu.memory_space<vmem>>, vector<1x1x8x16x4xbf16>
    %12 = vector.shape_cast %11 : vector<1x1x8x16x4xbf16> to vector<8x16x4xbf16>
    %c0_19 = arith.constant 0 : index
    %c0_20 = arith.constant 0 : index
    %c1_21 = arith.constant 1 : index
    %c1_22 = arith.constant 1 : index
    %c0_23 = arith.constant 0 : index
    %13 = vector.load %arg3[%c0_19, %c0_20, %c1_21, %c1_22, %c0_23] : memref<1x1x10x18x4xbf16, #tpu.memory_space<vmem>>, vector<1x1x8x16x4xbf16>
    %14 = vector.shape_cast %13 : vector<1x1x8x16x4xbf16> to vector<8x16x4xbf16>
    %c0_24 = arith.constant 0 : index
    %c0_25 = arith.constant 0 : index
    %c1_26 = arith.constant 1 : index
    %c2_27 = arith.constant 2 : index
    %c0_28 = arith.constant 0 : index
    %15 = vector.load %arg3[%c0_24, %c0_25, %c1_26, %c2_27, %c0_28] : memref<1x1x10x18x4xbf16, #tpu.memory_space<vmem>>, vector<1x1x8x16x4xbf16>
    %16 = vector.shape_cast %15 : vector<1x1x8x16x4xbf16> to vector<8x16x4xbf16>
    %c0_29 = arith.constant 0 : index
    %c0_30 = arith.constant 0 : index
    %c2_31 = arith.constant 2 : index
    %c0_32 = arith.constant 0 : index
    %c0_33 = arith.constant 0 : index
    %17 = vector.load %arg3[%c0_29, %c0_30, %c2_31, %c0_32, %c0_33] : memref<1x1x10x18x4xbf16, #tpu.memory_space<vmem>>, vector<1x1x8x16x4xbf16>
    %18 = vector.shape_cast %17 : vector<1x1x8x16x4xbf16> to vector<8x16x4xbf16>
    %c0_34 = arith.constant 0 : index
    %c0_35 = arith.constant 0 : index
    %c2_36 = arith.constant 2 : index
    %c1_37 = arith.constant 1 : index
    %c0_38 = arith.constant 0 : index
    %19 = vector.load %arg3[%c0_34, %c0_35, %c2_36, %c1_37, %c0_38] : memref<1x1x10x18x4xbf16, #tpu.memory_space<vmem>>, vector<1x1x8x16x4xbf16>
    %20 = vector.shape_cast %19 : vector<1x1x8x16x4xbf16> to vector<8x16x4xbf16>
    %c0_39 = arith.constant 0 : index
    %c0_40 = arith.constant 0 : index
    %c2_41 = arith.constant 2 : index
    %c2_42 = arith.constant 2 : index
    %c0_43 = arith.constant 0 : index
    %21 = vector.load %arg3[%c0_39, %c0_40, %c2_41, %c2_42, %c0_43] : memref<1x1x10x18x4xbf16, #tpu.memory_space<vmem>>, vector<1x1x8x16x4xbf16>
    %22 = vector.shape_cast %21 : vector<1x1x8x16x4xbf16> to vector<8x16x4xbf16>
    %23 = tpu.concatenate %6, %8, %10, %12, %14, %16, %18, %20, %22 in 2 : vector<8x16x4xbf16>, vector<8x16x4xbf16>, vector<8x16x4xbf16>, vector<8x16x4xbf16>, vector<8x16x4xbf16>, vector<8x16x4xbf16>, vector<8x16x4xbf16>, vector<8x16x4xbf16>, vector<8x16x4xbf16> -> vector<8x16x36xbf16>
    %24 = vector.shape_cast %23 : vector<8x16x36xbf16> to vector<128x36xbf16>
    %c0_44 = arith.constant 0 : index
    %c0_45 = arith.constant 0 : index
    %25 = vector.load %arg4[%c0_44, %c0_45] : memref<36x32xbf16, #tpu.memory_space<vmem>>, vector<36x32xbf16>
    %cst = arith.constant dense<0.000000e+00> : vector<128x32xf32>
    %26 = tpu.matmul %24, %25, %cst {dimension_numbers = #tpu.dot_dimension_numbers<[1], [0], [0], [1], [0, 0, 1, 1], [], []>} : vector<128x36xbf16>, vector<36x32xbf16>, vector<128x32xf32> -> vector<128x32xf32>
    %c0_i32_46 = arith.constant 0 : i32
    %27 = arith.cmpi eq, %arg1, %c0_i32_46 : i32
    %28 = arith.extui %27 : i1 to i32
    %c0_i32_47 = arith.constant 0 : i32
    %29 = arith.cmpi ne, %28, %c0_i32_47 : i32
    scf.if %29 {
      %c0_49 = arith.constant 0 : index
      %c0_50 = arith.constant 0 : index
      %33 = vector.load %arg6[%c0_49, %c0_50] : memref<1x32xf32, #tpu.memory_space<vmem>>, vector<1x32xf32>
      %cst_51 = arith.constant dense<0.000000e+00> : vector<32xf32>
      %34 = vector.multi_reduction <add>, %26, %cst_51 [0] : vector<128x32xf32> to vector<32xf32>
      %35 = vector.shape_cast %34 : vector<32xf32> to vector<1x32xf32>
      %36 = arith.addf %33, %35 : vector<1x32xf32>
      %c0_52 = arith.constant 0 : index
      %c0_53 = arith.constant 0 : index
      %37 = vector.load %arg6[%c0_52, %c0_53] : memref<1x32xf32, #tpu.memory_space<vmem>>, vector<1x32xf32>
      tpu.vector_store %arg6[%c0_52, %c0_53], %36 {strides = array<i32>} : memref<1x32xf32, #tpu.memory_space<vmem>>, vector<1x32xf32>,
      %c0_54 = arith.constant 0 : index
      %c0_55 = arith.constant 0 : index
      %38 = vector.load %arg7[%c0_54, %c0_55] : memref<1x32xf32, #tpu.memory_space<vmem>>, vector<1x32xf32>
      %39 = arith.mulf %26, %26 : vector<128x32xf32>
      %cst_56 = arith.constant dense<0.000000e+00> : vector<32xf32>
      %40 = vector.multi_reduction <add>, %39, %cst_56 [0] : vector<128x32xf32> to vector<32xf32>
      %41 = vector.shape_cast %40 : vector<32xf32> to vector<1x32xf32>
      %42 = arith.addf %38, %41 : vector<1x32xf32>
      %c0_57 = arith.constant 0 : index
      %c0_58 = arith.constant 0 : index
      %43 = vector.load %arg7[%c0_57, %c0_58] : memref<1x32xf32, #tpu.memory_space<vmem>>, vector<1x32xf32>
      tpu.vector_store %arg7[%c0_57, %c0_58], %42 {strides = array<i32>} : memref<1x32xf32, #tpu.memory_space<vmem>>, vector<1x32xf32>,
    } else {
    }
    %c1_i32 = arith.constant 1 : i32
    %30 = arith.cmpi eq, %arg1, %c1_i32 : i32
    %31 = arith.extui %30 : i1 to i32
    %c0_i32_48 = arith.constant 0 : i32
    %32 = arith.cmpi ne, %31, %c0_i32_48 : i32
    scf.if %32 {
      %c0_49 = arith.constant 0 : index
      %c0_50 = arith.constant 0 : index
      %33 = vector.load %arg6[%c0_49, %c0_50] : memref<1x32xf32, #tpu.memory_space<vmem>>, vector<1x32xf32>
      %c0_51 = arith.constant 0 : index
      %c0_52 = arith.constant 0 : index
      %34 = vector.load %arg7[%c0_51, %c0_52] : memref<1x32xf32, #tpu.memory_space<vmem>>, vector<1x32xf32>
      %35 = vector.extract_strided_slice %33 {offsets = [0, 0], sizes = [1, 8], strides = [1, 1]} : vector<1x32xf32> to vector<1x8xf32>
      %36 = vector.extract_strided_slice %33 {offsets = [0, 8], sizes = [1, 8], strides = [1, 1]} : vector<1x32xf32> to vector<1x8xf32>
      %37 = arith.addf %35, %36 : vector<1x8xf32>
      %38 = vector.extract_strided_slice %33 {offsets = [0, 16], sizes = [1, 8], strides = [1, 1]} : vector<1x32xf32> to vector<1x8xf32>
      %39 = arith.addf %37, %38 : vector<1x8xf32>
      %40 = vector.extract_strided_slice %33 {offsets = [0, 24], sizes = [1, 8], strides = [1, 1]} : vector<1x32xf32> to vector<1x8xf32>
      %41 = arith.addf %39, %40 : vector<1x8xf32>
      %42 = vector.extract_strided_slice %34 {offsets = [0, 0], sizes = [1, 8], strides = [1, 1]} : vector<1x32xf32> to vector<1x8xf32>
      %43 = vector.extract_strided_slice %34 {offsets = [0, 8], sizes = [1, 8], strides = [1, 1]} : vector<1x32xf32> to vector<1x8xf32>
      %44 = arith.addf %42, %43 : vector<1x8xf32>
      %45 = vector.extract_strided_slice %34 {offsets = [0, 16], sizes = [1, 8], strides = [1, 1]} : vector<1x32xf32> to vector<1x8xf32>
      %46 = arith.addf %44, %45 : vector<1x8xf32>
      %47 = vector.extract_strided_slice %34 {offsets = [0, 24], sizes = [1, 8], strides = [1, 1]} : vector<1x32xf32> to vector<1x8xf32>
      %48 = arith.addf %46, %47 : vector<1x8xf32>
      %cst_53 = arith.constant 9.765625E-4 : f32
      %49 = vector.broadcast %cst_53 : f32 to vector<1x8xf32>
      %50 = arith.mulf %41, %49 : vector<1x8xf32>
      %cst_54 = arith.constant 9.765625E-4 : f32
      %51 = vector.broadcast %cst_54 : f32 to vector<1x8xf32>
      %52 = arith.mulf %48, %51 : vector<1x8xf32>
      %53 = arith.mulf %50, %50 : vector<1x8xf32>
      %54 = arith.subf %52, %53 : vector<1x8xf32>
      %cst_55 = arith.constant 0.000000e+00 : f32
      %55 = vector.broadcast %cst_55 : f32 to vector<1x8xf32>
      %56 = arith.maximumf %54, %55 : vector<1x8xf32>
      %cst_56 = arith.constant 9.99999974E-6 : f32
      %57 = vector.broadcast %cst_56 : f32 to vector<1x8xf32>
      %58 = arith.addf %56, %57 : vector<1x8xf32>
      %59 = math.rsqrt %58 : vector<1x8xf32>
      %60 = tpu.concatenate %50, %50, %50, %50 in 1 : vector<1x8xf32>, vector<1x8xf32>, vector<1x8xf32>, vector<1x8xf32> -> vector<1x32xf32>
      %61 = tpu.concatenate %59, %59, %59, %59 in 1 : vector<1x8xf32>, vector<1x8xf32>, vector<1x8xf32>, vector<1x8xf32> -> vector<1x32xf32>
      %62 = vector.broadcast %60 : vector<1x32xf32> to vector<128x32xf32>
      %63 = arith.subf %26, %62 : vector<128x32xf32>
      %64 = vector.broadcast %61 : vector<1x32xf32> to vector<128x32xf32>
      %65 = arith.mulf %63, %64 : vector<128x32xf32>
      %cst_57 = arith.constant 0.000000e+00 : f32
      %66 = vector.broadcast %cst_57 : f32 to vector<128x32xf32>
      %67 = arith.maximumf %65, %66 : vector<128x32xf32>
      %c0_58 = arith.constant 0 : index
      %c0_59 = arith.constant 0 : index
      %c0_60 = arith.constant 0 : index
      %68 = vector.load %arg5[%c0_58, %c0_59, %c0_60] : memref<1x128x32xf32, #tpu.memory_space<vmem>>, vector<1x128x32xf32>
      %69 = vector.shape_cast %68 : vector<1x128x32xf32> to vector<128x32xf32>
      %70 = vector.shape_cast %67 : vector<128x32xf32> to vector<1x128x32xf32>
      tpu.vector_store %arg5[%c0_58, %c0_59, %c0_60], %70 {strides = array<i32>} : memref<1x128x32xf32, #tpu.memory_space<vmem>>, vector<1x128x32xf32>,
    } else {
    }
    return
  }
  func.func @transform_0(%arg0: i32, %arg1: i32, %arg2: i32) -> (i32, i32, i32, i32, i32) {
    %c0_i32 = arith.constant 0 : i32
    %c0_i32_0 = arith.constant 0 : i32
    %c0_i32_1 = arith.constant 0 : i32
    %c0_i32_2 = arith.constant 0 : i32
    return %arg0, %arg2, %c0_i32, %c0_i32_0, %c0_i32_1 : i32, i32, i32, i32, i32
  }
  func.func @transform_1(%arg0: i32, %arg1: i32, %arg2: i32) -> (i32, i32) {
    %c0_i32 = arith.constant 0 : i32
    %c0_i32_0 = arith.constant 0 : i32
    %c0_i32_1 = arith.constant 0 : i32
    return %c0_i32, %c0_i32_0 : i32, i32
  }
  func.func @transform_2(%arg0: i32, %arg1: i32, %arg2: i32) -> (i32, i32, i32) {
    %0 = arith.muli %arg2, %arg1 : i32
    %c0_i32 = arith.constant 0 : i32
    %c0_i32_0 = arith.constant 0 : i32
    return %arg0, %0, %c0_i32 : i32, i32, i32
  }
}

</mosaic_0001>

<llo_original>
// kernel: tpu_custom_call.1
$region0: #{tpu_custom_call.1}
  #allocation0 [shape = 'u32[]', space=smem, size = 0x4, offset = 0x4, fixed_abs, tag = 'smem constant byte address 0x4 - core index']
  #allocation1 [shape = 'u32[144,128]{1,0:T(1,128)}', space=vmem, size = 0x12000, scoped, tag = 'internal scratch']
  #allocation2 [shape = 'f32[1,32]{1,0:T(1,128)}', space=vmem, size = 0x200, scoped, tag = 'scratch operand']
  #allocation3 [shape = 'f32[1,32]{1,0:T(1,128)}', space=vmem, size = 0x200, scoped, tag = 'scratch operand']
  %s0 = inlined_call_operand.vmem [shape: bf16[2,2,10,18,4], index: 0, kind: input, shape index: {}]
  %s1 = inlined_call_operand.vmem [shape: bf16[36,32], index: 1, kind: input, shape index: {}]
  %s2 = inlined_call_operand.vmem [shape: f32[2,256,32], index: 2, kind: output, shape index: {}]
  %s3 = sld [smem:[#allocation0]]
  $region53: #{tpu_custom_call.1} parent=0
    _
  %s5 = ssub.s32 1, %s3
  %s6 = scalar_select 0, %s5, %s3
  loop: start=0, step=1, limit=10
  $region2: #{tpu_custom_call.1} parent=0 // loop_pre_header
    _
  $region3: #{tpu_custom_call.1} parent=0 // loop_header
    %s8 = sphi 0, %s12
    %p9 = scmp.ge.s32.totalorder %s8, 10
    %s15 = sphi 0, %s34
    %s16 = sphi 0, %s30
    %s17 = sphi 0, %s26
    %s18 = sphi 0, %s15
    %s19 = sphi 0, %s16
    %s20 = sphi 0, %s17
    %s21 = sphi 0, %s18
    %s22 = sphi 0, %s19
    %s23 = sphi 0, %s20
    %s39 = sphi 0, %s41
    %s42 = sphi 0, %s39
    %s43 = sphi 0, %s42
    %s59 = sphi 0, %s43
    %s63 = sphi 0, %s63
    %s65 = sphi 0, %s63
    %s66 = sphi 0, %s65
    %s80 = sphi 0, %s66
    %s90 = sphi 0, %s92
    %s93 = sphi 0, %s90
    %s94 = sphi 0, %s93
    %s110 = sphi 0, %s94
  $region4: #{tpu_custom_call.1} parent=0 // loop_header_branch
    %11 = sbr.rel (%p9) target = $region8
  $region5: #{tpu_custom_call.1} parent=0 // loop_body
    %s13 = ssub.s32 %s8, 1
    %s14 = ssub.s32 %s8, 2
    %s24 = sadd.s32 1, %s17
    %p25 = scmp.ge.s32.totalorder %s24, 2
    %s26 = scalar_select %p25, 0, %s24
    %s27 = sadd.s32 1, %s16
    %s28 = scalar_select %p25, %s27, %s16
    %p29 = scmp.ge.s32.totalorder %s28, 2
    %s30 = scalar_select %p29, 0, %s28
    %s31 = sadd.s32 1, %s15
    %s32 = scalar_select %p29, %s31, %s15
    %p33 = scmp.ge.s32.totalorder %s32, 2
    %s34 = scalar_select %p33, 0, %s32
    %s35 = ssub.s32 %s15, %s34
    %s36 = ssub.s32 %s17, %s26
    %s37 = sor.u32 %s35, %s36
    %p38 = scmp.eq.s32.totalorder %s37, 0
    %s40 = sadd.s32 %s39, 1
    %s41 = scalar_select %p38, %s39, %s40
    %p44 = pneg %p38
    %p45 = scmp.eq.s32.totalorder %s8, 7
    %p46 = por %p44, %p45
    %p47 = scmp.ne.s32.totalorder %s39, %s42
    %p48 = scmp.eq.s32.totalorder %s8, 0
    %p49 = por %p47, %p48
    %p50 = scmp.ne.s32.totalorder %s39, %s42
    %p51 = scmp.eq.s32.totalorder %s13, 7
    %p52 = por %p50, %p51
    %p53 = scmp.ne.s32.totalorder %s42, %s43
    %p54 = scmp.eq.s32.totalorder %s13, 0
    %p55 = por %p53, %p54
    %p56 = scmp.ne.s32.totalorder %s42, %s43
    %p57 = scmp.eq.s32.totalorder %s14, 7
    %p58 = por %p56, %p57
    %p60 = scmp.ne.s32.totalorder %s43, %s59
    %p61 = scmp.eq.s32.totalorder %s14, 0
    %p62 = por %p60, %p61
    %s64 = sadd.s32 %s63, 1
    %p67 = scmp.eq.s32.totalorder %s8, 7
    %p68 = scmp.ne.s32.totalorder %s63, %s65
    %p69 = scmp.eq.s32.totalorder %s8, 0
    %p70 = por %p68, %p69
    %p71 = scmp.ne.s32.totalorder %s63, %s65
    %p72 = scmp.eq.s32.totalorder %s13, 7
    %p73 = por %p71, %p72
    %p74 = scmp.ne.s32.totalorder %s65, %s66
    %p75 = scmp.eq.s32.totalorder %s13, 0
    %p76 = por %p74, %p75
    %p77 = scmp.ne.s32.totalorder %s65, %s66
    %p78 = scmp.eq.s32.totalorder %s14, 7
    %p79 = por %p77, %p78
    %p81 = scmp.ne.s32.totalorder %s66, %s80
    %p82 = scmp.eq.s32.totalorder %s14, 0
    %p83 = por %p81, %p82
    %s84 = smul.u32 %s17, %s16
    %s85 = smul.u32 %s26, %s30
    %s86 = ssub.s32 %s15, %s34
    %s87 = ssub.s32 %s84, %s85
    %s88 = sor.u32 %s86, %s87
    %p89 = scmp.eq.s32.totalorder %s88, 0
    %s91 = sadd.s32 %s90, 1
    %s92 = scalar_select %p89, %s90, %s91
    %p95 = pneg %p89
    %p96 = scmp.eq.s32.totalorder %s8, 7
    %p97 = por %p95, %p96
    %p98 = scmp.ne.s32.totalorder %s90, %s93
    %p99 = scmp.eq.s32.totalorder %s8, 0
    %p100 = por %p98, %p99
    %p101 = scmp.ne.s32.totalorder %s90, %s93
    %p102 = scmp.eq.s32.totalorder %s13, 7
    %p103 = por %p101, %p102
    %p104 = scmp.ne.s32.totalorder %s93, %s94
    %p105 = scmp.eq.s32.totalorder %s13, 0
    %p106 = por %p104, %p105
    %p107 = scmp.ne.s32.totalorder %s93, %s94
    %p108 = scmp.eq.s32.totalorder %s14, 7
    %p109 = por %p107, %p108
    %p111 = scmp.ne.s32.totalorder %s94, %s110
    %p112 = scmp.eq.s32.totalorder %s14, 0
    %p113 = por %p111, %p112
    %p114 = scmp.le.s32.totalorder 1, %s8
    %p115 = scmp.lt.s32.totalorder %s8, 9
    %p116 = pnand %p114, %p115
    %p117 = pneg %p116
    // Predicated region
    $region9: #{tpu_custom_call.1} parent=5 // pred_check
      _
    $region10: #{tpu_custom_call.1} parent=5 // pred_check_branch
      %119 = sbr.rel (%p116) target = $region12
    $region11: #{tpu_custom_call.1} parent=5 // pred_region
      %s120 = ssub.s32 %s8, 1
      // Predicated region
      $region13: #{tpu_custom_call.1} parent=11 // pred_check
        %p121 = pneg %p76
      $region14: #{tpu_custom_call.1} parent=11 // pred_check_branch
        %123 = sbr.rel (%p121) target = $region16
      $region15: #{tpu_custom_call.1} parent=11 // pred_region
        _
      $region16: #{tpu_custom_call.1} parent=11 // pred_fallthru
        _
    $region12: #{tpu_custom_call.1} parent=5 // pred_fallthru
      _
    %p124 = scmp.lt.s32.totalorder %s8, 8
    // Predicated region
    $region17: #{tpu_custom_call.1} parent=5 // pred_check
      %p125 = pneg %p124
    $region18: #{tpu_custom_call.1} parent=5 // pred_check_branch
      %127 = sbr.rel (%p125) target = $region20
    $region19: #{tpu_custom_call.1} parent=5 // pred_region
      // Predicated region
      $region21: #{tpu_custom_call.1} parent=19 // pred_check
        %p128 = pneg %p49
      $region22: #{tpu_custom_call.1} parent=19 // pred_check_branch
        %130 = sbr.rel (%p128) target = $region24
      $region23: #{tpu_custom_call.1} parent=19 // pred_region
        %p131 = scmp.lt.s32.totalorder %s15, 1
        %s132 = scalar_select %p131, %s15, 1
        %p133 = scmp.lt.s32.totalorder %s17, 1
        %s134 = scalar_select %p133, %s17, 1
        %s135 = smul.addr %s134, 30
        %s136 = smul.addr %s132, 60
        %s137 = sadd.s32 %s135, %s136
        %s138 = smul.addr %s137, 4
        %s139 = scalar_lea.vmem %s0, %s138
      $region24: #{tpu_custom_call.1} parent=19 // pred_fallthru
        _
    $region20: #{tpu_custom_call.1} parent=5 // pred_fallthru
      _
    %p140 = scmp.le.s32.totalorder 1, %s8
    %p141 = scmp.lt.s32.totalorder %s8, 9
    %p142 = pnand %p140, %p141
    %p143 = pneg %p142
    // Predicated region
    $region25: #{tpu_custom_call.1} parent=5 // pred_check
      _
    $region26: #{tpu_custom_call.1} parent=5 // pred_check_branch
      %145 = sbr.rel (%p142) target = $region28
    $region27: #{tpu_custom_call.1} parent=5 // pred_region
      %s146 = ssub.s32 %s8, 1
      %p147 = scmp.lt.s32.totalorder %s18, 1
      %s148 = scalar_select %p147, %s18, 1
      %p149 = scmp.lt.s32.totalorder %s20, 1
      %s150 = scalar_select %p149, %s20, 1
      %s151 = smul.addr %s150, 30
      %s152 = smul.addr %s148, 60
      %s153 = sadd.s32 %s151, %s152
      %s154 = smul.addr %s153, 4
      %s155 = scalar_lea.vmem %s0, %s154
      %p156 = pneg %p55
      %p157 = pneg %p52
      %p158 = pneg %p76
      %p159 = pneg %p73
      %p160 = pneg %p106
      %p161 = pneg %p103
      %s162 = smul.u32 %s20, %s19
      %s163 = smul.u32 16, %s162
      %p164 = scmp.lt.s32.totalorder %s18, 1
      %s165 = scalar_select %p164, %s18, 1
      %p166 = scmp.lt.s32.totalorder %s163, 31
      %s167 = scalar_select %p166, %s163, 31
      %s168 = smul.addr %s165, 32
      %s169 = sadd.s32 %s167, %s168
      %s170 = smul.addr %s169, 8
      %s171 = scalar_lea.vmem %s2, %s170
      %p172 = scmp.lt.s32.totalorder %s18, 1
      %s173 = scalar_select %p172, %s18, 1
      %p174 = scmp.lt.s32.totalorder %s20, 1
      %s175 = scalar_select %p174, %s20, 1
      %s176 = smul.addr %s175, 30
      %s177 = smul.addr %s173, 60
      %s178 = sadd.s32 %s176, %s177
      %s179 = smul.addr %s178, 4
      %s180 = scalar_lea.vmem %s0, %s179
      %s181 = smul.u32 %s20, %s19
      %s182 = smul.u32 16, %s181
      %p183 = scmp.lt.s32.totalorder %s18, 1
      %s184 = scalar_select %p183, %s18, 1
      %p185 = scmp.lt.s32.totalorder %s182, 31
      %s186 = scalar_select %p185, %s182, 31
      %s187 = smul.addr %s184, 32
      %s188 = sadd.s32 %s186, %s187
      %s189 = smul.addr %s188, 8
      %s190 = scalar_lea.vmem %s2, %s189
      %s191 = smul.u32 %s20, %s19
      %s192 = smul.u32 16, %s191
      %p194 = scmp.eq.s32.totalorder %s19, 0
      %p195 = scmp.eq.s32.totalorder %s20, 0
      %p196 = pnand %p194, %p195
      %p197 = pneg %p196
      // Predicated region
      $region29: #{tpu_custom_call.1} parent=27 // pred_check
        _
      $region30: #{tpu_custom_call.1} parent=27 // pred_check_branch
        %199 = sbr.rel (%p196) target = $region32
      $region31: #{tpu_custom_call.1} parent=27 // pred_region
        %vm200 = vcmask 253952
        %201 = vst.msk [vmem:[#allocation2] sm:$0x1] %vm200, 0.0
        %202 = vst.msk [vmem:[#allocation3] sm:$0x1] %vm200, 0.0
      $region32: #{tpu_custom_call.1} parent=27 // pred_fallthru
        _
      %v203 = vld [vmem:[%s180] sm:$0xf]
      %v204 = vld [vmem:[%s180 + $0x4] sm:$0xf]
      %v205 = vld [vmem:[%s180 + $0xc] sm:$0xf]
      %v206 = vld [vmem:[%s180 + $0x10] sm:$0xf]
      %v207 = vld [vmem:[%s180 + $0x18] sm:$0xf]
      %v208 = vld [vmem:[%s180 + $0x1c] sm:$0xf]
      %v209 = vld [vmem:[%s180 + $0x24] sm:$0xf]
      %v210 = vld [vmem:[%s180 + $0x28] sm:$0xf]
      %v211 = vld [vmem:[%s180 + $0x30] sm:$0xf]
      %v212 = vld [vmem:[%s180 + $0x34] sm:$0xf]
      %v213 = vld [vmem:[%s180 + $0x3c] sm:$0xf]
      %v214 = vld [vmem:[%s180 + $0x40] sm:$0xf]
      %v215 = vld [vmem:[%s180 + $0x48] sm:$0xf]
      %v216 = vld [vmem:[%s180 + $0x4c] sm:$0xf]
      %v217 = vld [vmem:[%s180 + $0x54] sm:$0xf]
      %v218 = vld [vmem:[%s180 + $0x58] sm:$0xf]
      %v219 = vld [vmem:[%s180 + $0x8] sm:$0x1]
      %v220 = vld [vmem:[%s180 + $0x14] sm:$0x1]
      %v221 = vld [vmem:[%s180 + $0x20] sm:$0x1]
      %v222 = vld [vmem:[%s180 + $0x2c] sm:$0x1]
      %v223 = vld [vmem:[%s180 + $0x38] sm:$0x1]
      %v224 = vld [vmem:[%s180 + $0x44] sm:$0x1]
      %v225 = vld [vmem:[%s180 + $0x50] sm:$0x1]
      %v226 = vld [vmem:[%s180 + $0x5c] sm:$0x1]
      %v227 = vld [vmem:[%s180] sm:$0xe]
      %v228 = vld [vmem:[%s180 + $0xc] sm:$0xe]
      %v229 = vld [vmem:[%s180 + $0x18] sm:$0xe]
      %v230 = vld [vmem:[%s180 + $0x24] sm:$0xe]
      %v231 = vld [vmem:[%s180 + $0x30] sm:$0xe]
      %v232 = vld [vmem:[%s180 + $0x3c] sm:$0xe]
      %v233 = vld [vmem:[%s180 + $0x48] sm:$0xe]
      %v234 = vld [vmem:[%s180 + $0x54] sm:$0xe]
      %s235 = scalar_lea.vmem %s180, 12
      %v236 = vld [vmem:[%s235] sm:$0xf]
      %v237 = vld [vmem:[%s235 + $0x4] sm:$0xf]
      %v238 = vld [vmem:[%s235 + $0xc] sm:$0xf]
      %v239 = vld [vmem:[%s235 + $0x10] sm:$0xf]
      %v240 = vld [vmem:[%s235 + $0x18] sm:$0xf]
      %v241 = vld [vmem:[%s235 + $0x1c] sm:$0xf]
      %v242 = vld [vmem:[%s235 + $0x24] sm:$0xf]
      %v243 = vld [vmem:[%s235 + $0x28] sm:$0xf]
      %v244 = vld [vmem:[%s235 + $0x30] sm:$0xf]
      %v245 = vld [vmem:[%s235 + $0x34] sm:$0xf]
      %v246 = vld [vmem:[%s235 + $0x3c] sm:$0xf]
      %v247 = vld [vmem:[%s235 + $0x40] sm:$0xf]
      %v248 = vld [vmem:[%s235 + $0x48] sm:$0xf]
      %v249 = vld [vmem:[%s235 + $0x4c] sm:$0xf]
      %v250 = vld [vmem:[%s235 + $0x54] sm:$0xf]
      %v251 = vld [vmem:[%s235 + $0x58] sm:$0xf]
      %v252 = vld [vmem:[%s235 + $0x8] sm:$0x1]
      %v253 = vld [vmem:[%s235 + $0x14] sm:$0x1]
      %v254 = vld [vmem:[%s235 + $0x20] sm:$0x1]
      %v255 = vld [vmem:[%s235 + $0x2c] sm:$0x1]
      %v256 = vld [vmem:[%s235 + $0x38] sm:$0x1]
      %v257 = vld [vmem:[%s235 + $0x44] sm:$0x1]
      %v258 = vld [vmem:[%s235 + $0x50] sm:$0x1]
      %v259 = vld [vmem:[%s235 + $0x5c] sm:$0x1]
      %v260 = vld [vmem:[%s235] sm:$0xe]
      %v261 = vld [vmem:[%s235 + $0xc] sm:$0xe]
      %v262 = vld [vmem:[%s235 + $0x18] sm:$0xe]
      %v263 = vld [vmem:[%s235 + $0x24] sm:$0xe]
      %v264 = vld [vmem:[%s235 + $0x30] sm:$0xe]
      %v265 = vld [vmem:[%s235 + $0x3c] sm:$0xe]
      %v266 = vld [vmem:[%s235 + $0x48] sm:$0xe]
      %v267 = vld [vmem:[%s235 + $0x54] sm:$0xe]
      %s268 = scalar_lea.vmem %s180, 24
      %v269 = vld [vmem:[%s268] sm:$0xf]
      %v270 = vld [vmem:[%s268 + $0x4] sm:$0xf]
      %v271 = vld [vmem:[%s268 + $0xc] sm:$0xf]
      %v272 = vld [vmem:[%s268 + $0x10] sm:$0xf]
      %v273 = vld [vmem:[%s268 + $0x18] sm:$0xf]
      %v274 = vld [vmem:[%s268 + $0x1c] sm:$0xf]
      %v275 = vld [vmem:[%s268 + $0x24] sm:$0xf]
      %v276 = vld [vmem:[%s268 + $0x28] sm:$0xf]
      %v277 = vld [vmem:[%s268 + $0x30] sm:$0xf]
      %v278 = vld [vmem:[%s268 + $0x34] sm:$0xf]
      %v279 = vld [vmem:[%s268 + $0x3c] sm:$0xf]
      %v280 = vld [vmem:[%s268 + $0x40] sm:$0xf]
      %v281 = vld [vmem:[%s268 + $0x48] sm:$0xf]
      %v282 = vld [vmem:[%s268 + $0x4c] sm:$0xf]
      %v283 = vld [vmem:[%s268 + $0x54] sm:$0xf]
      %v284 = vld [vmem:[%s268 + $0x58] sm:$0xf]
      %v285 = vld [vmem:[%s268 + $0x8] sm:$0x1]
      %v286 = vld [vmem:[%s268 + $0x14] sm:$0x1]
      %v287 = vld [vmem:[%s268 + $0x20] sm:$0x1]
      %v288 = vld [vmem:[%s268 + $0x2c] sm:$0x1]
      %v289 = vld [vmem:[%s268 + $0x38] sm:$0x1]
      %v290 = vld [vmem:[%s268 + $0x44] sm:$0x1]
      %v291 = vld [vmem:[%s268 + $0x50] sm:$0x1]
      %v292 = vld [vmem:[%s268 + $0x5c] sm:$0x1]
      %v293 = vld [vmem:[%s268] sm:$0xe]
      %v294 = vld [vmem:[%s268 + $0xc] sm:$0xe]
      %v295 = vld [vmem:[%s268 + $0x18] sm:$0xe]
      %v296 = vld [vmem:[%s268 + $0x24] sm:$0xe]
      %v297 = vld [vmem:[%s268 + $0x30] sm:$0xe]
      %v298 = vld [vmem:[%s268 + $0x3c] sm:$0xe]
      %v299 = vld [vmem:[%s268 + $0x48] sm:$0xe]
      %v300 = vld [vmem:[%s268 + $0x54] sm:$0xe]
      %v317 = vunpack.c.l.b16 %v203
      %v318 = vunpack.c.l.b16 %v204
      %v319 = vunpack.c.l.b16 %v205
      %v320 = vunpack.c.l.b16 %v206
      %v321 = vunpack.c.l.b16 %v207
      %v322 = vunpack.c.l.b16 %v208
      %v323 = vunpack.c.l.b16 %v209
      %v324 = vunpack.c.l.b16 %v210
      %v325 = vunpack.c.l.b16 %v211
      %v326 = vunpack.c.l.b16 %v212
      %v327 = vunpack.c.l.b16 %v213
      %v328 = vunpack.c.l.b16 %v214
      %v329 = vunpack.c.l.b16 %v215
      %v330 = vunpack.c.l.b16 %v216
      %v331 = vunpack.c.l.b16 %v217
      %v332 = vunpack.c.l.b16 %v218
      %v333 = vpack.c.b16 %v318, %v317
      %v334 = vpack.c.b16 %v320, %v319
      %v335 = vpack.c.b16 %v322, %v321
      %v336 = vpack.c.b16 %v324, %v323
      %v337 = vpack.c.b16 %v326, %v325
      %v338 = vpack.c.b16 %v328, %v327
      %v339 = vpack.c.b16 %v330, %v329
      %v340 = vpack.c.b16 %v332, %v331
      %v349 = vunpack.c.l.b16 %v219
      %v350 = vunpack.c.l.b16 %v220
      %v351 = vunpack.c.l.b16 %v221
      %v352 = vunpack.c.l.b16 %v222
      %v353 = vunpack.c.l.b16 %v223
      %v354 = vunpack.c.l.b16 %v224
      %v355 = vunpack.c.l.b16 %v225
      %v356 = vunpack.c.l.b16 %v226
      %v357 = vpack.c.b16 %v349, %v349
      %v358 = vpack.c.b16 %v350, %v350
      %v359 = vpack.c.b16 %v351, %v351
      %v360 = vpack.c.b16 %v352, %v352
      %v361 = vpack.c.b16 %v353, %v353
      %v362 = vpack.c.b16 %v354, %v354
      %v363 = vpack.c.b16 %v355, %v355
      %v364 = vpack.c.b16 %v356, %v356
      %vm365 = vsmask.f32 7424
      %v367 = vshrl.u32 %v333, 16
      %v369 = vshll.u32 %v333, 16
      %v371 = vrot.slane %v369, 1
      %v372 = vor.u32 %v367, %v371
      %v374 = vshll.u32 %v357, 16
      %v376 = vrot.slane %v374, 1
      %v377 = vsel %vm365, %v372, %v376
      %v379 = vshrl.u32 %v334, 16
      %v381 = vshll.u32 %v334, 16
      %v383 = vrot.slane %v381, 1
      %v384 = vor.u32 %v379, %v383
      %v386 = vshll.u32 %v358, 16
      %v388 = vrot.slane %v386, 1
      %v389 = vsel %vm365, %v384, %v388
      %v391 = vshrl.u32 %v335, 16
      %v393 = vshll.u32 %v335, 16
      %v395 = vrot.slane %v393, 1
      %v396 = vor.u32 %v391, %v395
      %v398 = vshll.u32 %v359, 16
      %v400 = vrot.slane %v398, 1
      %v401 = vsel %vm365, %v396, %v400
      %v403 = vshrl.u32 %v336, 16
      %v405 = vshll.u32 %v336, 16
      %v407 = vrot.slane %v405, 1
      %v408 = vor.u32 %v403, %v407
      %v410 = vshll.u32 %v360, 16
      %v412 = vrot.slane %v410, 1
      %v413 = vsel %vm365, %v408, %v412
      %v415 = vshrl.u32 %v337, 16
      %v417 = vshll.u32 %v337, 16
      %v419 = vrot.slane %v417, 1
      %v420 = vor.u32 %v415, %v419
      %v422 = vshll.u32 %v361, 16
      %v424 = vrot.slane %v422, 1
      %v425 = vsel %vm365, %v420, %v424
      %v427 = vshrl.u32 %v338, 16
      %v429 = vshll.u32 %v338, 16
      %v431 = vrot.slane %v429, 1
      %v432 = vor.u32 %v427, %v431
      %v434 = vshll.u32 %v362, 16
      %v436 = vrot.slane %v434, 1
      %v437 = vsel %vm365, %v432, %v436
      %v439 = vshrl.u32 %v339, 16
      %v441 = vshll.u32 %v339, 16
      %v443 = vrot.slane %v441, 1
      %v444 = vor.u32 %v439, %v443
      %v446 = vshll.u32 %v363, 16
      %v448 = vrot.slane %v446, 1
      %v449 = vsel %vm365, %v444, %v448
      %v451 = vshrl.u32 %v340, 16
      %v453 = vshll.u32 %v340, 16
      %v455 = vrot.slane %v453, 1
      %v456 = vor.u32 %v451, %v455
      %v458 = vshll.u32 %v364, 16
      %v460 = vrot.slane %v458, 1
      %v461 = vsel %vm365, %v456, %v460
      %462 = vrot.lane.b32.xlu0 %v377, 4
      %v463 = vpop.permute.xlu0 %462
      %464 = vrot.lane.b32.xlu0 %v389, 4
      %v465 = vpop.permute.xlu0 %464
      %466 = vrot.lane.b32.xlu0 %v401, 4
      %v467 = vpop.permute.xlu0 %466
      %468 = vrot.lane.b32.xlu0 %v413, 4
      %v469 = vpop.permute.xlu0 %468
      %470 = vrot.lane.b32.xlu0 %v425, 4
      %v471 = vpop.permute.xlu0 %470
      %472 = vrot.lane.b32.xlu0 %v437, 4
      %v473 = vpop.permute.xlu0 %472
      %474 = vrot.lane.b32.xlu0 %v449, 4
      %v475 = vpop.permute.xlu0 %474
      %476 = vrot.lane.b32.xlu0 %v461, 4
      %v477 = vpop.permute.xlu0 %476
      %v486 = vunpack.c.l.b16 %v227
      %v487 = vunpack.c.l.b16 %v228
      %v488 = vunpack.c.l.b16 %v229
      %v489 = vunpack.c.l.b16 %v230
      %v490 = vunpack.c.l.b16 %v231
      %v491 = vunpack.c.l.b16 %v232
      %v492 = vunpack.c.l.b16 %v233
      %v493 = vunpack.c.l.b16 %v234
      %v494 = vpack.c.b16 %v318, %v486
      %v495 = vpack.c.b16 %v320, %v487
      %v496 = vpack.c.b16 %v322, %v488
      %v497 = vpack.c.b16 %v324, %v489
      %v498 = vpack.c.b16 %v326, %v490
      %v499 = vpack.c.b16 %v328, %v491
      %v500 = vpack.c.b16 %v330, %v492
      %v501 = vpack.c.b16 %v332, %v493
      %vm502 = vcmask 1046528
      %v503 = vrot.slane %v494, 1
      %v504 = vrot.slane %v357, 1
      %v505 = vsel %vm502, %v503, %v504
      %v506 = vrot.slane %v495, 1
      %v507 = vrot.slane %v358, 1
      %v508 = vsel %vm502, %v506, %v507
      %v509 = vrot.slane %v496, 1
      %v510 = vrot.slane %v359, 1
      %v511 = vsel %vm502, %v509, %v510
      %v512 = vrot.slane %v497, 1
      %v513 = vrot.slane %v360, 1
      %v514 = vsel %vm502, %v512, %v513
      %v515 = vrot.slane %v498, 1
      %v516 = vrot.slane %v361, 1
      %v517 = vsel %vm502, %v515, %v516
      %v518 = vrot.slane %v499, 1
      %v519 = vrot.slane %v362, 1
      %v520 = vsel %vm502, %v518, %v519
      %v521 = vrot.slane %v500, 1
      %v522 = vrot.slane %v363, 1
      %v523 = vsel %vm502, %v521, %v522
      %v524 = vrot.slane %v501, 1
      %v525 = vrot.slane %v364, 1
      %v526 = vsel %vm502, %v524, %v525
      %527 = vrot.lane.b32.xlu0 %v505, 8
      %v528 = vpop.permute.xlu0 %527
      %529 = vrot.lane.b32.xlu0 %v508, 8
      %v530 = vpop.permute.xlu0 %529
      %531 = vrot.lane.b32.xlu0 %v511, 8
      %v532 = vpop.permute.xlu0 %531
      %533 = vrot.lane.b32.xlu0 %v514, 8
      %v534 = vpop.permute.xlu0 %533
      %535 = vrot.lane.b32.xlu0 %v517, 8
      %v536 = vpop.permute.xlu0 %535
      %537 = vrot.lane.b32.xlu0 %v520, 8
      %v538 = vpop.permute.xlu0 %537
      %539 = vrot.lane.b32.xlu0 %v523, 8
      %v540 = vpop.permute.xlu0 %539
      %541 = vrot.lane.b32.xlu0 %v526, 8
      %v542 = vpop.permute.xlu0 %541
      %v559 = vunpack.c.l.b16 %v236
      %v560 = vunpack.c.l.b16 %v237
      %v561 = vunpack.c.l.b16 %v238
      %v562 = vunpack.c.l.b16 %v239
      %v563 = vunpack.c.l.b16 %v240
      %v564 = vunpack.c.l.b16 %v241
      %v565 = vunpack.c.l.b16 %v242
      %v566 = vunpack.c.l.b16 %v243
      %v567 = vunpack.c.l.b16 %v244
      %v568 = vunpack.c.l.b16 %v245
      %v569 = vunpack.c.l.b16 %v246
      %v570 = vunpack.c.l.b16 %v247
      %v571 = vunpack.c.l.b16 %v248
      %v572 = vunpack.c.l.b16 %v249
      %v573 = vunpack.c.l.b16 %v250
      %v574 = vunpack.c.l.b16 %v251
      %v575 = vpack.c.b16 %v560, %v559
      %v576 = vpack.c.b16 %v562, %v561
      %v577 = vpack.c.b16 %v564, %v563
      %v578 = vpack.c.b16 %v566, %v565
      %v579 = vpack.c.b16 %v568, %v567
      %v580 = vpack.c.b16 %v570, %v569
      %v581 = vpack.c.b16 %v572, %v571
      %v582 = vpack.c.b16 %v574, %v573
      %583 = vrot.lane.b32.xlu0 %v575, 12
      %v584 = vpop.permute.xlu0 %583
      %585 = vrot.lane.b32.xlu0 %v576, 12
      %v586 = vpop.permute.xlu0 %585
      %587 = vrot.lane.b32.xlu0 %v577, 12
      %v588 = vpop.permute.xlu0 %587
      %589 = vrot.lane.b32.xlu0 %v578, 12
      %v590 = vpop.permute.xlu0 %589
      %591 = vrot.lane.b32.xlu0 %v579, 12
      %v592 = vpop.permute.xlu0 %591
      %593 = vrot.lane.b32.xlu0 %v580, 12
      %v594 = vpop.permute.xlu0 %593
      %595 = vrot.lane.b32.xlu0 %v581, 12
      %v596 = vpop.permute.xlu0 %595
      %597 = vrot.lane.b32.xlu0 %v582, 12
      %v598 = vpop.permute.xlu0 %597
      %v607 = vunpack.c.l.b16 %v252
      %v608 = vunpack.c.l.b16 %v253
      %v609 = vunpack.c.l.b16 %v254
      %v610 = vunpack.c.l.b16 %v255
      %v611 = vunpack.c.l.b16 %v256
      %v612 = vunpack.c.l.b16 %v257
      %v613 = vunpack.c.l.b16 %v258
      %v614 = vunpack.c.l.b16 %v259
      %v615 = vpack.c.b16 %v607, %v607
      %v616 = vpack.c.b16 %v608, %v608
      %v617 = vpack.c.b16 %v609, %v609
      %v618 = vpack.c.b16 %v610, %v610
      %v619 = vpack.c.b16 %v611, %v611
      %v620 = vpack.c.b16 %v612, %v612
      %v621 = vpack.c.b16 %v613, %v613
      %v622 = vpack.c.b16 %v614, %v614
      %v624 = vshrl.u32 %v575, 16
      %v626 = vshll.u32 %v575, 16
      %v628 = vrot.slane %v626, 1
      %v629 = vor.u32 %v624, %v628
      %v631 = vshll.u32 %v615, 16
      %v633 = vrot.slane %v631, 1
      %v634 = vsel %vm365, %v629, %v633
      %v636 = vshrl.u32 %v576, 16
      %v638 = vshll.u32 %v576, 16
      %v640 = vrot.slane %v638, 1
      %v641 = vor.u32 %v636, %v640
      %v643 = vshll.u32 %v616, 16
      %v645 = vrot.slane %v643, 1
      %v646 = vsel %vm365, %v641, %v645
      %v648 = vshrl.u32 %v577, 16
      %v650 = vshll.u32 %v577, 16
      %v652 = vrot.slane %v650, 1
      %v653 = vor.u32 %v648, %v652
      %v655 = vshll.u32 %v617, 16
      %v657 = vrot.slane %v655, 1
      %v658 = vsel %vm365, %v653, %v657
      %v660 = vshrl.u32 %v578, 16
      %v662 = vshll.u32 %v578, 16
      %v664 = vrot.slane %v662, 1
      %v665 = vor.u32 %v660, %v664
      %v667 = vshll.u32 %v618, 16
      %v669 = vrot.slane %v667, 1
      %v670 = vsel %vm365, %v665, %v669
      %v672 = vshrl.u32 %v579, 16
      %v674 = vshll.u32 %v579, 16
      %v676 = vrot.slane %v674, 1
      %v677 = vor.u32 %v672, %v676
      %v679 = vshll.u32 %v619, 16
      %v681 = vrot.slane %v679, 1
      %v682 = vsel %vm365, %v677, %v681
      %v684 = vshrl.u32 %v580, 16
      %v686 = vshll.u32 %v580, 16
      %v688 = vrot.slane %v686, 1
      %v689 = vor.u32 %v684, %v688
      %v691 = vshll.u32 %v620, 16
      %v693 = vrot.slane %v691, 1
      %v694 = vsel %vm365, %v689, %v693
      %v696 = vshrl.u32 %v581, 16
      %v698 = vshll.u32 %v581, 16
      %v700 = vrot.slane %v698, 1
      %v701 = vor.u32 %v696, %v700
      %v703 = vshll.u32 %v621, 16
      %v705 = vrot.slane %v703, 1
      %v706 = vsel %vm365, %v701, %v705
      %v708 = vshrl.u32 %v582, 16
      %v710 = vshll.u32 %v582, 16
      %v712 = vrot.slane %v710, 1
      %v713 = vor.u32 %v708, %v712
      %v715 = vshll.u32 %v622, 16
      %v717 = vrot.slane %v715, 1
      %v718 = vsel %vm365, %v713, %v717
      %719 = vrot.lane.b32.xlu0 %v634, 16
      %v720 = vpop.permute.xlu0 %719
      %721 = vrot.lane.b32.xlu0 %v646, 16
      %v722 = vpop.permute.xlu0 %721
      %723 = vrot.lane.b32.xlu0 %v658, 16
      %v724 = vpop.permute.xlu0 %723
      %725 = vrot.lane.b32.xlu0 %v670, 16
      %v726 = vpop.permute.xlu0 %725
      %727 = vrot.lane.b32.xlu0 %v682, 16
      %v728 = vpop.permute.xlu0 %727
      %729 = vrot.lane.b32.xlu0 %v694, 16
      %v730 = vpop.permute.xlu0 %729
      %731 = vrot.lane.b32.xlu0 %v706, 16
      %v732 = vpop.permute.xlu0 %731
      %733 = vrot.lane.b32.xlu0 %v718, 16
      %v734 = vpop.permute.xlu0 %733
      %v743 = vunpack.c.l.b16 %v260
      %v744 = vunpack.c.l.b16 %v261
      %v745 = vunpack.c.l.b16 %v262
      %v746 = vunpack.c.l.b16 %v263
      %v747 = vunpack.c.l.b16 %v264
      %v748 = vunpack.c.l.b16 %v265
      %v749 = vunpack.c.l.b16 %v266
      %v750 = vunpack.c.l.b16 %v267
      %v751 = vpack.c.b16 %v560, %v743
      %v752 = vpack.c.b16 %v562, %v744
      %v753 = vpack.c.b16 %v564, %v745
      %v754 = vpack.c.b16 %v566, %v746
      %v755 = vpack.c.b16 %v568, %v747
      %v756 = vpack.c.b16 %v570, %v748
      %v757 = vpack.c.b16 %v572, %v749
      %v758 = vpack.c.b16 %v574, %v750
      %v759 = vrot.slane %v751, 1
      %v760 = vrot.slane %v615, 1
      %v761 = vsel %vm502, %v759, %v760
      %v762 = vrot.slane %v752, 1
      %v763 = vrot.slane %v616, 1
      %v764 = vsel %vm502, %v762, %v763
      %v765 = vrot.slane %v753, 1
      %v766 = vrot.slane %v617, 1
      %v767 = vsel %vm502, %v765, %v766
      %v768 = vrot.slane %v754, 1
      %v769 = vrot.slane %v618, 1
      %v770 = vsel %vm502, %v768, %v769
      %v771 = vrot.slane %v755, 1
      %v772 = vrot.slane %v619, 1
      %v773 = vsel %vm502, %v771, %v772
      %v774 = vrot.slane %v756, 1
      %v775 = vrot.slane %v620, 1
      %v776 = vsel %vm502, %v774, %v775
      %v777 = vrot.slane %v757, 1
      %v778 = vrot.slane %v621, 1
      %v779 = vsel %vm502, %v777, %v778
      %v780 = vrot.slane %v758, 1
      %v781 = vrot.slane %v622, 1
      %v782 = vsel %vm502, %v780, %v781
      %783 = vrot.lane.b32.xlu0 %v761, 20
      %v784 = vpop.permute.xlu0 %783
      %785 = vrot.lane.b32.xlu0 %v764, 20
      %v786 = vpop.permute.xlu0 %785
      %787 = vrot.lane.b32.xlu0 %v767, 20
      %v788 = vpop.permute.xlu0 %787
      %789 = vrot.lane.b32.xlu0 %v770, 20
      %v790 = vpop.permute.xlu0 %789
      %791 = vrot.lane.b32.xlu0 %v773, 20
      %v792 = vpop.permute.xlu0 %791
      %793 = vrot.lane.b32.xlu0 %v776, 20
      %v794 = vpop.permute.xlu0 %793
      %795 = vrot.lane.b32.xlu0 %v779, 20
      %v796 = vpop.permute.xlu0 %795
      %797 = vrot.lane.b32.xlu0 %v782, 20
      %v798 = vpop.permute.xlu0 %797
      %v815 = vunpack.c.l.b16 %v269
      %v816 = vunpack.c.l.b16 %v270
      %v817 = vunpack.c.l.b16 %v271
      %v818 = vunpack.c.l.b16 %v272
      %v819 = vunpack.c.l.b16 %v273
      %v820 = vunpack.c.l.b16 %v274
      %v821 = vunpack.c.l.b16 %v275
      %v822 = vunpack.c.l.b16 %v276
      %v823 = vunpack.c.l.b16 %v277
      %v824 = vunpack.c.l.b16 %v278
      %v825 = vunpack.c.l.b16 %v279
      %v826 = vunpack.c.l.b16 %v280
      %v827 = vunpack.c.l.b16 %v281
      %v828 = vunpack.c.l.b16 %v282
      %v829 = vunpack.c.l.b16 %v283
      %v830 = vunpack.c.l.b16 %v284
      %v831 = vpack.c.b16 %v816, %v815
      %v832 = vpack.c.b16 %v818, %v817
      %v833 = vpack.c.b16 %v820, %v819
      %v834 = vpack.c.b16 %v822, %v821
      %v835 = vpack.c.b16 %v824, %v823
      %v836 = vpack.c.b16 %v826, %v825
      %v837 = vpack.c.b16 %v828, %v827
      %v838 = vpack.c.b16 %v830, %v829
      %839 = vrot.lane.b32.xlu0 %v831, 24
      %v840 = vpop.permute.xlu0 %839
      %841 = vrot.lane.b32.xlu0 %v832, 24
      %v842 = vpop.permute.xlu0 %841
      %843 = vrot.lane.b32.xlu0 %v833, 24
      %v844 = vpop.permute.xlu0 %843
      %845 = vrot.lane.b32.xlu0 %v834, 24
      %v846 = vpop.permute.xlu0 %845
      %847 = vrot.lane.b32.xlu0 %v835, 24
      %v848 = vpop.permute.xlu0 %847
      %849 = vrot.lane.b32.xlu0 %v836, 24
      %v850 = vpop.permute.xlu0 %849
      %851 = vrot.lane.b32.xlu0 %v837, 24
      %v852 = vpop.permute.xlu0 %851
      %853 = vrot.lane.b32.xlu0 %v838, 24
      %v854 = vpop.permute.xlu0 %853
      %v863 = vunpack.c.l.b16 %v285
      %v864 = vunpack.c.l.b16 %v286
      %v865 = vunpack.c.l.b16 %v287
      %v866 = vunpack.c.l.b16 %v288
      %v867 = vunpack.c.l.b16 %v289
      %v868 = vunpack.c.l.b16 %v290
      %v869 = vunpack.c.l.b16 %v291
      %v870 = vunpack.c.l.b16 %v292
      %v871 = vpack.c.b16 %v863, %v863
      %v872 = vpack.c.b16 %v864, %v864
      %v873 = vpack.c.b16 %v865, %v865
      %v874 = vpack.c.b16 %v866, %v866
      %v875 = vpack.c.b16 %v867, %v867
      %v876 = vpack.c.b16 %v868, %v868
      %v877 = vpack.c.b16 %v869, %v869
      %v878 = vpack.c.b16 %v870, %v870
      %v880 = vshrl.u32 %v831, 16
      %v882 = vshll.u32 %v831, 16
      %v884 = vrot.slane %v882, 1
      %v885 = vor.u32 %v880, %v884
      %v887 = vshll.u32 %v871, 16
      %v889 = vrot.slane %v887, 1
      %v890 = vsel %vm365, %v885, %v889
      %v892 = vshrl.u32 %v832, 16
      %v894 = vshll.u32 %v832, 16
      %v896 = vrot.slane %v894, 1
      %v897 = vor.u32 %v892, %v896
      %v899 = vshll.u32 %v872, 16
      %v901 = vrot.slane %v899, 1
      %v902 = vsel %vm365, %v897, %v901
      %v904 = vshrl.u32 %v833, 16
      %v906 = vshll.u32 %v833, 16
      %v908 = vrot.slane %v906, 1
      %v909 = vor.u32 %v904, %v908
      %v911 = vshll.u32 %v873, 16
      %v913 = vrot.slane %v911, 1
      %v914 = vsel %vm365, %v909, %v913
      %v916 = vshrl.u32 %v834, 16
      %v918 = vshll.u32 %v834, 16
      %v920 = vrot.slane %v918, 1
      %v921 = vor.u32 %v916, %v920
      %v923 = vshll.u32 %v874, 16
      %v925 = vrot.slane %v923, 1
      %v926 = vsel %vm365, %v921, %v925
      %v928 = vshrl.u32 %v835, 16
      %v930 = vshll.u32 %v835, 16
      %v932 = vrot.slane %v930, 1
      %v933 = vor.u32 %v928, %v932
      %v935 = vshll.u32 %v875, 16
      %v937 = vrot.slane %v935, 1
      %v938 = vsel %vm365, %v933, %v937
      %v940 = vshrl.u32 %v836, 16
      %v942 = vshll.u32 %v836, 16
      %v944 = vrot.slane %v942, 1
      %v945 = vor.u32 %v940, %v944
      %v947 = vshll.u32 %v876, 16
      %v949 = vrot.slane %v947, 1
      %v950 = vsel %vm365, %v945, %v949
      %v952 = vshrl.u32 %v837, 16
      %v954 = vshll.u32 %v837, 16
      %v956 = vrot.slane %v954, 1
      %v957 = vor.u32 %v952, %v956
      %v959 = vshll.u32 %v877, 16
      %v961 = vrot.slane %v959, 1
      %v962 = vsel %vm365, %v957, %v961
      %v964 = vshrl.u32 %v838, 16
      %v966 = vshll.u32 %v838, 16
      %v968 = vrot.slane %v966, 1
      %v969 = vor.u32 %v964, %v968
      %v971 = vshll.u32 %v878, 16
      %v973 = vrot.slane %v971, 1
      %v974 = vsel %vm365, %v969, %v973
      %975 = vrot.lane.b32.xlu0 %v890, 28
      %v976 = vpop.permute.xlu0 %975
      %977 = vrot.lane.b32.xlu0 %v902, 28
      %v978 = vpop.permute.xlu0 %977
      %979 = vrot.lane.b32.xlu0 %v914, 28
      %v980 = vpop.permute.xlu0 %979
      %981 = vrot.lane.b32.xlu0 %v926, 28
      %v982 = vpop.permute.xlu0 %981
      %983 = vrot.lane.b32.xlu0 %v938, 28
      %v984 = vpop.permute.xlu0 %983
      %985 = vrot.lane.b32.xlu0 %v950, 28
      %v986 = vpop.permute.xlu0 %985
      %987 = vrot.lane.b32.xlu0 %v962, 28
      %v988 = vpop.permute.xlu0 %987
      %989 = vrot.lane.b32.xlu0 %v974, 28
      %v990 = vpop.permute.xlu0 %989
      %v999 = vunpack.c.l.b16 %v293
      %v1000 = vunpack.c.l.b16 %v294
      %v1001 = vunpack.c.l.b16 %v295
      %v1002 = vunpack.c.l.b16 %v296
      %v1003 = vunpack.c.l.b16 %v297
      %v1004 = vunpack.c.l.b16 %v298
      %v1005 = vunpack.c.l.b16 %v299
      %v1006 = vunpack.c.l.b16 %v300
      %v1007 = vpack.c.b16 %v816, %v999
      %v1008 = vpack.c.b16 %v818, %v1000
      %v1009 = vpack.c.b16 %v820, %v1001
      %v1010 = vpack.c.b16 %v822, %v1002
      %v1011 = vpack.c.b16 %v824, %v1003
      %v1012 = vpack.c.b16 %v826, %v1004
      %v1013 = vpack.c.b16 %v828, %v1005
      %v1014 = vpack.c.b16 %v830, %v1006
      %v1015 = vrot.slane %v1007, 1
      %v1016 = vrot.slane %v871, 1
      %v1017 = vsel %vm502, %v1015, %v1016
      %v1018 = vrot.slane %v1008, 1
      %v1019 = vrot.slane %v872, 1
      %v1020 = vsel %vm502, %v1018, %v1019
      %v1021 = vrot.slane %v1009, 1
      %v1022 = vrot.slane %v873, 1
      %v1023 = vsel %vm502, %v1021, %v1022
      %v1024 = vrot.slane %v1010, 1
      %v1025 = vrot.slane %v874, 1
      %v1026 = vsel %vm502, %v1024, %v1025
      %v1027 = vrot.slane %v1011, 1
      %v1028 = vrot.slane %v875, 1
      %v1029 = vsel %vm502, %v1027, %v1028
      %v1030 = vrot.slane %v1012, 1
      %v1031 = vrot.slane %v876, 1
      %v1032 = vsel %vm502, %v1030, %v1031
      %v1033 = vrot.slane %v1013, 1
      %v1034 = vrot.slane %v877, 1
      %v1035 = vsel %vm502, %v1033, %v1034
      %v1036 = vrot.slane %v1014, 1
      %v1037 = vrot.slane %v878, 1
      %v1038 = vsel %vm502, %v1036, %v1037
      %1039 = vrot.lane.b32.xlu0 %v1017, 32
      %v1040 = vpop.permute.xlu0 %1039
      %1041 = vrot.lane.b32.xlu0 %v1020, 32
      %v1042 = vpop.permute.xlu0 %1041
      %1043 = vrot.lane.b32.xlu0 %v1023, 32
      %v1044 = vpop.permute.xlu0 %1043
      %1045 = vrot.lane.b32.xlu0 %v1026, 32
      %v1046 = vpop.permute.xlu0 %1045
      %1047 = vrot.lane.b32.xlu0 %v1029, 32
      %v1048 = vpop.permute.xlu0 %1047
      %1049 = vrot.lane.b32.xlu0 %v1032, 32
      %v1050 = vpop.permute.xlu0 %1049
      %1051 = vrot.lane.b32.xlu0 %v1035, 32
      %v1052 = vpop.permute.xlu0 %1051
      %1053 = vrot.lane.b32.xlu0 %v1038, 32
      %v1054 = vpop.permute.xlu0 %1053
      %vm1055 = vcmask 31744
      %v1057 = vsel %vm1055, %v333, %v463
      %v1059 = vsel %vm1055, %v334, %v465
      %v1061 = vsel %vm1055, %v335, %v467
      %v1063 = vsel %vm1055, %v336, %v469
      %v1065 = vsel %vm1055, %v337, %v471
      %v1067 = vsel %vm1055, %v338, %v473
      %v1069 = vsel %vm1055, %v339, %v475
      %v1071 = vsel %vm1055, %v340, %v477
      %vm1072 = vcmask 64512
      %v1074 = vsel %vm1072, %v1057, %v528
      %v1076 = vsel %vm1072, %v1059, %v530
      %v1078 = vsel %vm1072, %v1061, %v532
      %v1080 = vsel %vm1072, %v1063, %v534
      %v1082 = vsel %vm1072, %v1065, %v536
      %v1084 = vsel %vm1072, %v1067, %v538
      %v1086 = vsel %vm1072, %v1069, %v540
      %v1088 = vsel %vm1072, %v1071, %v542
      %vm1089 = vcmask 97280
      %v1091 = vsel %vm1089, %v1074, %v584
      %v1093 = vsel %vm1089, %v1076, %v586
      %v1095 = vsel %vm1089, %v1078, %v588
      %v1097 = vsel %vm1089, %v1080, %v590
      %v1099 = vsel %vm1089, %v1082, %v592
      %v1101 = vsel %vm1089, %v1084, %v594
      %v1103 = vsel %vm1089, %v1086, %v596
      %v1105 = vsel %vm1089, %v1088, %v598
      %vm1106 = vcmask 130048
      %v1108 = vsel %vm1106, %v1091, %v720
      %v1110 = vsel %vm1106, %v1093, %v722
      %v1112 = vsel %vm1106, %v1095, %v724
      %v1114 = vsel %vm1106, %v1097, %v726
      %v1116 = vsel %vm1106, %v1099, %v728
      %v1118 = vsel %vm1106, %v1101, %v730
      %v1120 = vsel %vm1106, %v1103, %v732
      %v1122 = vsel %vm1106, %v1105, %v734
      %vm1123 = vcmask 162816
      %v1125 = vsel %vm1123, %v1108, %v784
      %v1127 = vsel %vm1123, %v1110, %v786
      %v1129 = vsel %vm1123, %v1112, %v788
      %v1131 = vsel %vm1123, %v1114, %v790
      %v1133 = vsel %vm1123, %v1116, %v792
      %v1135 = vsel %vm1123, %v1118, %v794
      %v1137 = vsel %vm1123, %v1120, %v796
      %v1139 = vsel %vm1123, %v1122, %v798
      %vm1140 = vcmask 195584
      %v1142 = vsel %vm1140, %v1125, %v840
      %v1144 = vsel %vm1140, %v1127, %v842
      %v1146 = vsel %vm1140, %v1129, %v844
      %v1148 = vsel %vm1140, %v1131, %v846
      %v1150 = vsel %vm1140, %v1133, %v848
      %v1152 = vsel %vm1140, %v1135, %v850
      %v1154 = vsel %vm1140, %v1137, %v852
      %v1156 = vsel %vm1140, %v1139, %v854
      %vm1157 = vcmask 228352
      %v1159 = vsel %vm1157, %v1142, %v976
      %v1161 = vsel %vm1157, %v1144, %v978
      %v1163 = vsel %vm1157, %v1146, %v980
      %v1165 = vsel %vm1157, %v1148, %v982
      %v1167 = vsel %vm1157, %v1150, %v984
      %v1169 = vsel %vm1157, %v1152, %v986
      %v1171 = vsel %vm1157, %v1154, %v988
      %v1173 = vsel %vm1157, %v1156, %v990
      %vm1174 = vcmask 261120
      %v1176 = vsel %vm1174, %v1159, %v1040
      %v1178 = vsel %vm1174, %v1161, %v1042
      %v1180 = vsel %vm1174, %v1163, %v1044
      %v1182 = vsel %vm1174, %v1165, %v1046
      %v1184 = vsel %vm1174, %v1167, %v1048
      %v1186 = vsel %vm1174, %v1169, %v1050
      %v1188 = vsel %vm1174, %v1171, %v1052
      %v1190 = vsel %vm1174, %v1173, %v1054
      %v1191 = vld [vmem:[%s1] sm:$0xf]
      %v1192 = vld [vmem:[%s1 + $0x4] sm:$0xf]
      %v1193 = vld [vmem:[%s1 + $0x8] sm:$0xf]
      %v1194 = vld [vmem:[%s1 + $0xc] sm:$0xf]
      %v1195 = vld [vmem:[%s1 + $0x10] sm:$0x3]
      %v1201 = vunpack.c.l.b16 %v1191
      %v1202 = vunpack.c.l.b16 %v1192
      %v1203 = vunpack.c.l.b16 %v1193
      %v1204 = vunpack.c.l.b16 %v1194
      %v1205 = vunpack.c.l.b16 %v1195
      %v1206 = vpack.c.b16 %v1202, %v1201
      %v1207 = vpack.c.b16 %v1204, %v1203
      %v1208 = vpack.c.b16 %v1205, %v1205
      %vm1211 = vcmask 293888
      %v1212 = vsel %vm1211, %v1176, 0
      %v1214 = vsel %vm1211, %v1178, 0
      %v1216 = vsel %vm1211, %v1180, 0
      %v1218 = vsel %vm1211, %v1182, 0
      %v1220 = vsel %vm1211, %v1184, 0
      %v1222 = vsel %vm1211, %v1186, 0
      %v1224 = vsel %vm1211, %v1188, 0
      %v1226 = vsel %vm1211, %v1190, 0
      %vm1228 = vcmask 1041408
      %v1230 = vsel %vm1228, %v1208, 0
      %1232 = vmatprep.subr.bf16.mxu0 0
      %1233 = vmatpush1.bf16.msra.mxu0 %v1206
      %1234 = vmatprep.subr.bf16.mxu0 0
      %1235 = vmatpush1.bf16.msra.mxu0 %v1207
      %1236 = vmatprep.subr.bf16.mxu0 0
      %1237 = vmatpush1.bf16.msra.mxu0 %v1230
      %1238 = vmatprep.subr.bf16.mxu0 0
      %1239 = vmatpush1.bf16.msra.mxu0 0
      %1240 = vmatprep.subr.bf16.mxu0 0
      %1241 = vmatpush1.bf16.msra.mxu0 0
      %1242 = vmatprep.subr.bf16.mxu0 0
      %1243 = vmatpush1.bf16.msra.mxu0 0
      %1244 = vmatprep.subr.bf16.mxu0 0
      %1245 = vmatpush1.bf16.msra.mxu0 0
      %1246 = vmatprep.subr.bf16.mxu0 0
      %1247 = vmatpush1.bf16.msra.mxu0 0
      %1248 = vmatprep.subr.bf16.mxu0 0
      %1249 = vmatpush1.bf16.msra.mxu0 0
      %1250 = vmatprep.subr.bf16.mxu0 0
      %1251 = vmatpush1.bf16.msra.mxu0 0
      %1252 = vmatprep.subr.bf16.mxu0 0
      %1253 = vmatpush1.bf16.msra.mxu0 0
      %1254 = vmatprep.subr.bf16.mxu0 0
      %1255 = vmatpush1.bf16.msra.mxu0 0
      %1256 = vmatprep.subr.bf16.mxu0 0
      %1257 = vmatpush1.bf16.msra.mxu0 0
      %1258 = vmatprep.subr.bf16.mxu0 0
      %1259 = vmatpush1.bf16.msra.mxu0 0
      %1260 = vmatprep.subr.bf16.mxu0 0
      %1261 = vmatpush1.bf16.msra.mxu0 0
      %1262 = vmatprep.subr.bf16.mxu0 0
      %1263 = vmatpush1.bf16.msra.mxu0 0
      %1264 = vmatprep.mubr.bf16.mxu0 0
      %1265 = vmatmul.mubr.bf16.gmra.mrb[0].mxu0 %v1212
      %v1266 = vpop.f32.mrb[0].mxu0
      %v1267 = vadd.f32 0.0, %v1266
      %v1268 = vpop.f32.mrb[0].mxu0
      %v1269 = vpop.f32.mrb[0].mxu0
      %v1270 = vadd.f32 0.0, %v1269
      %v1271 = vpop.f32.mrb[0].mxu0
      %1272 = vmatprep.mubr.bf16.mxu0 0
      %1273 = vmatmul.mubr.bf16.gmra.mrb[0].mxu0 %v1214
      %v1274 = vpop.f32.mrb[0].mxu0
      %v1275 = vadd.f32 0.0, %v1274
      %v1276 = vpop.f32.mrb[0].mxu0
      %v1277 = vpop.f32.mrb[0].mxu0
      %v1278 = vadd.f32 0.0, %v1277
      %v1279 = vpop.f32.mrb[0].mxu0
      %1280 = vmatprep.mubr.bf16.mxu0 0
      %1281 = vmatmul.mubr.bf16.gmra.mrb[0].mxu0 %v1216
      %v1282 = vpop.f32.mrb[0].mxu0
      %v1283 = vadd.f32 0.0, %v1282
      %v1284 = vpop.f32.mrb[0].mxu0
      %v1285 = vpop.f32.mrb[0].mxu0
      %v1286 = vadd.f32 0.0, %v1285
      %v1287 = vpop.f32.mrb[0].mxu0
      %1288 = vmatprep.mubr.bf16.mxu0 0
      %1289 = vmatmul.mubr.bf16.gmra.mrb[0].mxu0 %v1218
      %v1290 = vpop.f32.mrb[0].mxu0
      %v1291 = vadd.f32 0.0, %v1290
      %v1292 = vpop.f32.mrb[0].mxu0
      %v1293 = vpop.f32.mrb[0].mxu0
      %v1294 = vadd.f32 0.0, %v1293
      %v1295 = vpop.f32.mrb[0].mxu0
      %1296 = vmatprep.mubr.bf16.mxu0 0
      %1297 = vmatmul.mubr.bf16.gmra.mrb[0].mxu0 %v1220
      %v1298 = vpop.f32.mrb[0].mxu0
      %v1299 = vadd.f32 0.0, %v1298
      %v1300 = vpop.f32.mrb[0].mxu0
      %v1301 = vpop.f32.mrb[0].mxu0
      %v1302 = vadd.f32 0.0, %v1301
      %v1303 = vpop.f32.mrb[0].mxu0
      %1304 = vmatprep.mubr.bf16.mxu0 0
      %1305 = vmatmul.mubr.bf16.gmra.mrb[0].mxu0 %v1222
      %v1306 = vpop.f32.mrb[0].mxu0
      %v1307 = vadd.f32 0.0, %v1306
      %v1308 = vpop.f32.mrb[0].mxu0
      %v1309 = vpop.f32.mrb[0].mxu0
      %v1310 = vadd.f32 0.0, %v1309
      %v1311 = vpop.f32.mrb[0].mxu0
      %1312 = vmatprep.mubr.bf16.mxu0 0
      %1313 = vmatmul.mubr.bf16.gmra.mrb[0].mxu0 %v1224
      %v1314 = vpop.f32.mrb[0].mxu0
      %v1315 = vadd.f32 0.0, %v1314
      %v1316 = vpop.f32.mrb[0].mxu0
      %v1317 = vpop.f32.mrb[0].mxu0
      %v1318 = vadd.f32 0.0, %v1317
      %v1319 = vpop.f32.mrb[0].mxu0
      %1320 = vmatprep.mubr.bf16.mxu0 0
      %1321 = vmatmul.mubr.bf16.gmra.mrb[0].mxu0 %v1226
      %v1322 = vpop.f32.mrb[0].mxu0
      %v1323 = vadd.f32 0.0, %v1322
      %v1324 = vpop.f32.mrb[0].mxu0
      %v1325 = vpop.f32.mrb[0].mxu0
      %v1326 = vadd.f32 0.0, %v1325
      %v1327 = vpop.f32.mrb[0].mxu0
      %1328 = vdwg.mxu0
      // Predicated region
      $region33: #{tpu_custom_call.1} parent=27 // pred_check
        %p1329 = pneg %p194
      $region34: #{tpu_custom_call.1} parent=27 // pred_check_branch
        %1331 = sbr.rel (%p1329) target = $region36
      $region35: #{tpu_custom_call.1} parent=27 // pred_region
        %v1332 = vld [vmem:[#allocation2] sm:$0x1]
        %v1333 = vsel %vm1174, %v1267, 0.0
        %v1334 = vsel %vm1174, %v1270, 0.0
        %v1335 = vadd.f32 %v1333, %v1334
        %v1336 = vsel %vm1174, %v1275, 0.0
        %v1337 = vadd.f32 %v1335, %v1336
        %v1338 = vsel %vm1174, %v1278, 0.0
        %v1339 = vadd.f32 %v1337, %v1338
        %v1340 = vsel %vm1174, %v1283, 0.0
        %v1341 = vadd.f32 %v1339, %v1340
        %v1342 = vsel %vm1174, %v1286, 0.0
        %v1343 = vadd.f32 %v1341, %v1342
        %v1344 = vsel %vm1174, %v1291, 0.0
        %v1345 = vadd.f32 %v1343, %v1344
        %v1346 = vsel %vm1174, %v1294, 0.0
        %v1347 = vadd.f32 %v1345, %v1346
        %v1348 = vsel %vm1174, %v1299, 0.0
        %v1349 = vadd.f32 %v1347, %v1348
        %v1350 = vsel %vm1174, %v1302, 0.0
        %v1351 = vadd.f32 %v1349, %v1350
        %v1352 = vsel %vm1174, %v1307, 0.0
        %v1353 = vadd.f32 %v1351, %v1352
        %v1354 = vsel %vm1174, %v1310, 0.0
        %v1355 = vadd.f32 %v1353, %v1354
        %v1356 = vsel %vm1174, %v1315, 0.0
        %v1357 = vadd.f32 %v1355, %v1356
        %v1358 = vsel %vm1174, %v1318, 0.0
        %v1359 = vadd.f32 %v1357, %v1358
        %v1360 = vsel %vm1174, %v1323, 0.0
        %v1361 = vadd.f32 %v1359, %v1360
        %v1362 = vsel %vm1174, %v1326, 0.0
        %v1363 = vadd.f32 %v1361, %v1362
        %v1364 = vrot.slane %v1363, 4
        %v1365 = vadd.f32 %v1363, %v1364
        %v1366 = vrot.slane %v1365, 2
        %v1367 = vadd.f32 %v1365, %v1366
        %v1368 = vrot.slane %v1367, 1
        %v1369 = vadd.f32 %v1367, %v1368
        %v1370 = vadd.f32 %v1332, %v1369
        %vm1371 = vcmask 253952
        %1372 = vst.msk [vmem:[#allocation2] sm:$0x1] %vm1371, %v1370
        %v1373 = vld [vmem:[#allocation3] sm:$0x1]
        %v1374 = vmul.f32 %v1267, %v1267
        %v1375 = vmul.f32 %v1270, %v1270
        %v1376 = vmul.f32 %v1275, %v1275
        %v1377 = vmul.f32 %v1278, %v1278
        %v1378 = vmul.f32 %v1283, %v1283
        %v1379 = vmul.f32 %v1286, %v1286
        %v1380 = vmul.f32 %v1291, %v1291
        %v1381 = vmul.f32 %v1294, %v1294
        %v1382 = vmul.f32 %v1299, %v1299
        %v1383 = vmul.f32 %v1302, %v1302
        %v1384 = vmul.f32 %v1307, %v1307
        %v1385 = vmul.f32 %v1310, %v1310
        %v1386 = vmul.f32 %v1315, %v1315
        %v1387 = vmul.f32 %v1318, %v1318
        %v1388 = vmul.f32 %v1323, %v1323
        %v1389 = vmul.f32 %v1326, %v1326
        %v1390 = vsel %vm1174, %v1374, 0.0
        %v1391 = vsel %vm1174, %v1375, 0.0
        %v1392 = vadd.f32 %v1390, %v1391
        %v1393 = vsel %vm1174, %v1376, 0.0
        %v1394 = vadd.f32 %v1392, %v1393
        %v1395 = vsel %vm1174, %v1377, 0.0
        %v1396 = vadd.f32 %v1394, %v1395
        %v1397 = vsel %vm1174, %v1378, 0.0
        %v1398 = vadd.f32 %v1396, %v1397
        %v1399 = vsel %vm1174, %v1379, 0.0
        %v1400 = vadd.f32 %v1398, %v1399
        %v1401 = vsel %vm1174, %v1380, 0.0
        %v1402 = vadd.f32 %v1400, %v1401
        %v1403 = vsel %vm1174, %v1381, 0.0
        %v1404 = vadd.f32 %v1402, %v1403
        %v1405 = vsel %vm1174, %v1382, 0.0
        %v1406 = vadd.f32 %v1404, %v1405
        %v1407 = vsel %vm1174, %v1383, 0.0
        %v1408 = vadd.f32 %v1406, %v1407
        %v1409 = vsel %vm1174, %v1384, 0.0
        %v1410 = vadd.f32 %v1408, %v1409
        %v1411 = vsel %vm1174, %v1385, 0.0
        %v1412 = vadd.f32 %v1410, %v1411
        %v1413 = vsel %vm1174, %v1386, 0.0
        %v1414 = vadd.f32 %v1412, %v1413
        %v1415 = vsel %vm1174, %v1387, 0.0
        %v1416 = vadd.f32 %v1414, %v1415
        %v1417 = vsel %vm1174, %v1388, 0.0
        %v1418 = vadd.f32 %v1416, %v1417
        %v1419 = vsel %vm1174, %v1389, 0.0
        %v1420 = vadd.f32 %v1418, %v1419
        %v1421 = vrot.slane %v1420, 4
        %v1422 = vadd.f32 %v1420, %v1421
        %v1423 = vrot.slane %v1422, 2
        %v1424 = vadd.f32 %v1422, %v1423
        %v1425 = vrot.slane %v1424, 1
        %v1426 = vadd.f32 %v1424, %v1425
        %v1427 = vadd.f32 %v1373, %v1426
        %1428 = vst.msk [vmem:[#allocation3] sm:$0x1] %vm1371, %v1427
      $region36: #{tpu_custom_call.1} parent=27 // pred_fallthru
        _
      %p1429 = scmp.eq.s32.totalorder %s19, 1
      // Predicated region
      $region37: #{tpu_custom_call.1} parent=27 // pred_check
        %p1430 = pneg %p1429
      $region38: #{tpu_custom_call.1} parent=27 // pred_check_branch
        %1432 = sbr.rel (%p1430) target = $region40
      $region39: #{tpu_custom_call.1} parent=27 // pred_region
        %v1433 = vld [vmem:[#allocation2] sm:$0x1]
        %v1434 = vld [vmem:[#allocation3] sm:$0x1]
        %1436 = vrot.lane.b32.xlu0 %v1433, 120
        %v1437 = vpop.permute.xlu0 %1436
        %v1439 = vadd.f32 %v1433, %v1437
        %1440 = vrot.lane.b32.xlu0 %v1433, 112
        %v1441 = vpop.permute.xlu0 %1440
        %v1443 = vadd.f32 %v1439, %v1441
        %1444 = vrot.lane.b32.xlu0 %v1433, 104
        %v1445 = vpop.permute.xlu0 %1444
        %v1447 = vadd.f32 %v1443, %v1445
        %1449 = vrot.lane.b32.xlu0 %v1434, 120
        %v1450 = vpop.permute.xlu0 %1449
        %v1452 = vadd.f32 %v1434, %v1450
        %1453 = vrot.lane.b32.xlu0 %v1434, 112
        %v1454 = vpop.permute.xlu0 %1453
        %v1456 = vadd.f32 %v1452, %v1454
        %1457 = vrot.lane.b32.xlu0 %v1434, 104
        %v1458 = vpop.permute.xlu0 %1457
        %v1460 = vadd.f32 %v1456, %v1458
        %v1461 = vmul.f32 %v1447, 0.0009765625
        %v1462 = vmul.f32 %v1460, 0.0009765625
        %v1463 = vmul.f32 %v1461, %v1461
        %v1464 = vsub.f32 %v1462, %v1463
        %v1465 = vmax.f32 %v1464, 0.0
        %v1466 = vadd.f32 %v1465, 1e-05
        %v1467 = vrsqrt.pop %v1466
        %v1469 = vlaneseq
        %v1470 = vshrl.u32 %v1469, 7
        %v1471 = vsub.s32 0, %v1470
        %v1472 = vrot.slane %v1461, %v1471
        %1473 = vrot.lane.b32.xlu0 %v1472, 8
        %v1474 = vpop.permute.xlu0 %1473
        %1476 = vrot.lane.b32.xlu0 %v1472, 16
        %v1477 = vpop.permute.xlu0 %1476
        %1479 = vrot.lane.b32.xlu0 %v1472, 24
        %v1480 = vpop.permute.xlu0 %1479
        %v1482 = vsel %vm1072, %v1461, %v1474
        %v1483 = vsel %vm1106, %v1482, %v1477
        %v1484 = vsel %vm1140, %v1483, %v1480
        %v1486 = vlaneseq
        %v1487 = vshrl.u32 %v1486, 7
        %v1488 = vsub.s32 0, %v1487
        %v1489 = vrot.slane %v1467, %v1488
        %1490 = vrot.lane.b32.xlu0 %v1489, 8
        %v1491 = vpop.permute.xlu0 %1490
        %1493 = vrot.lane.b32.xlu0 %v1489, 16
        %v1494 = vpop.permute.xlu0 %1493
        %1496 = vrot.lane.b32.xlu0 %v1489, 24
        %v1497 = vpop.permute.xlu0 %1496
        %v1499 = vsel %vm1072, %v1467, %v1491
        %v1500 = vsel %vm1106, %v1499, %v1494
        %v1501 = vsel %vm1140, %v1500, %v1497
        %v1502 = vlaneseq
        %v1503 = vshrl.u32 %v1502, 7
        %v1504 = vsub.s32 0, %v1503
        %v1505 = vrot.slane %v1484, %v1504
        %v1506 = vsub.f32 %v1267, %v1505
        %v1507 = vsub.f32 %v1270, %v1505
        %v1508 = vsub.f32 %v1275, %v1505
        %v1509 = vsub.f32 %v1278, %v1505
        %v1510 = vsub.f32 %v1283, %v1505
        %v1511 = vsub.f32 %v1286, %v1505
        %v1512 = vsub.f32 %v1291, %v1505
        %v1513 = vsub.f32 %v1294, %v1505
        %v1514 = vsub.f32 %v1299, %v1505
        %v1515 = vsub.f32 %v1302, %v1505
        %v1516 = vsub.f32 %v1307, %v1505
        %v1517 = vsub.f32 %v1310, %v1505
        %v1518 = vsub.f32 %v1315, %v1505
        %v1519 = vsub.f32 %v1318, %v1505
        %v1520 = vsub.f32 %v1323, %v1505
        %v1521 = vsub.f32 %v1326, %v1505
        %v1522 = vlaneseq
        %v1523 = vshrl.u32 %v1522, 7
        %v1524 = vsub.s32 0, %v1523
        %v1525 = vrot.slane %v1501, %v1524
        %v1526 = vmul.f32 %v1506, %v1525
        %v1527 = vmul.f32 %v1507, %v1525
        %v1528 = vmul.f32 %v1508, %v1525
        %v1529 = vmul.f32 %v1509, %v1525
        %v1530 = vmul.f32 %v1510, %v1525
        %v1531 = vmul.f32 %v1511, %v1525
        %v1532 = vmul.f32 %v1512, %v1525
        %v1533 = vmul.f32 %v1513, %v1525
        %v1534 = vmul.f32 %v1514, %v1525
        %v1535 = vmul.f32 %v1515, %v1525
        %v1536 = vmul.f32 %v1516, %v1525
        %v1537 = vmul.f32 %v1517, %v1525
        %v1538 = vmul.f32 %v1518, %v1525
        %v1539 = vmul.f32 %v1519, %v1525
        %v1540 = vmul.f32 %v1520, %v1525
        %v1541 = vmul.f32 %v1521, %v1525
        %v1542 = vmax.f32 %v1526, 0.0
        %v1543 = vmax.f32 %v1527, 0.0
        %v1544 = vmax.f32 %v1528, 0.0
        %v1545 = vmax.f32 %v1529, 0.0
        %v1546 = vmax.f32 %v1530, 0.0
        %v1547 = vmax.f32 %v1531, 0.0
        %v1548 = vmax.f32 %v1532, 0.0
        %v1549 = vmax.f32 %v1533, 0.0
        %v1550 = vmax.f32 %v1534, 0.0
        %v1551 = vmax.f32 %v1535, 0.0
        %v1552 = vmax.f32 %v1536, 0.0
        %v1553 = vmax.f32 %v1537, 0.0
        %v1554 = vmax.f32 %v1538, 0.0
        %v1555 = vmax.f32 %v1539, 0.0
        %v1556 = vmax.f32 %v1540, 0.0
        %v1557 = vmax.f32 %v1541, 0.0
        %1558 = vst.msk [vmem:[%s190] sm:$0xff] %vm1174, %v1542
        %1559 = vst.msk [vmem:[%s190 + $0x8] sm:$0xff] %vm1174, %v1543
        %1560 = vst.msk [vmem:[%s190 + $0x10] sm:$0xff] %vm1174, %v1544
        %1561 = vst.msk [vmem:[%s190 + $0x18] sm:$0xff] %vm1174, %v1545
        %1562 = vst.msk [vmem:[%s190 + $0x20] sm:$0xff] %vm1174, %v1546
        %1563 = vst.msk [vmem:[%s190 + $0x28] sm:$0xff] %vm1174, %v1547
        %1564 = vst.msk [vmem:[%s190 + $0x30] sm:$0xff] %vm1174, %v1548
        %1565 = vst.msk [vmem:[%s190 + $0x38] sm:$0xff] %vm1174, %v1549
        %1566 = vst.msk [vmem:[%s190 + $0x40] sm:$0xff] %vm1174, %v1550
        %1567 = vst.msk [vmem:[%s190 + $0x48] sm:$0xff] %vm1174, %v1551
        %1568 = vst.msk [vmem:[%s190 + $0x50] sm:$0xff] %vm1174, %v1552
        %1569 = vst.msk [vmem:[%s190 + $0x58] sm:$0xff] %vm1174, %v1553
        %1570 = vst.msk [vmem:[%s190 + $0x60] sm:$0xff] %vm1174, %v1554
        %1571 = vst.msk [vmem:[%s190 + $0x68] sm:$0xff] %vm1174, %v1555
        %1572 = vst.msk [vmem:[%s190 + $0x70] sm:$0xff] %vm1174, %v1556
        %1573 = vst.msk [vmem:[%s190 + $0x78] sm:$0xff] %vm1174, %v1557
      $region40: #{tpu_custom_call.1} parent=27 // pred_fallthru
        _
      %s1574 = smul.u32 %s20, %s19
      %s1575 = smul.u32 16, %s1574
      %p1576 = scmp.lt.s32.totalorder %s18, 1
      %s1577 = scalar_select %p1576, %s18, 1
      %p1578 = scmp.lt.s32.totalorder %s1575, 31
      %s1579 = scalar_select %p1578, %s1575, 31
      %s1580 = smul.addr %s1577, 32
      %s1581 = sadd.s32 %s1579, %s1580
      %s1582 = smul.addr %s1581, 8
      %s1583 = scalar_lea.vmem %s2, %s1582
      // Predicated region
      $region41: #{tpu_custom_call.1} parent=27 // pred_check
        %p1584 = pneg %p103
      $region42: #{tpu_custom_call.1} parent=27 // pred_check_branch
        %1586 = sbr.rel (%p1584) target = $region44
      $region43: #{tpu_custom_call.1} parent=27 // pred_region
        %s1587 = smul.u32 %s20, %s19
        %s1588 = smul.u32 16, %s1587
      $region44: #{tpu_custom_call.1} parent=27 // pred_fallthru
        _
    $region28: #{tpu_custom_call.1} parent=5 // pred_fallthru
      _
    %p1589 = scmp.le.s32.totalorder 2, %s8
    // Predicated region
    $region45: #{tpu_custom_call.1} parent=5 // pred_check
      %p1590 = pneg %p1589
    $region46: #{tpu_custom_call.1} parent=5 // pred_check_branch
      %1592 = sbr.rel (%p1590) target = $region48
    $region47: #{tpu_custom_call.1} parent=5 // pred_region
      %s1593 = ssub.s32 %s8, 2
      // Predicated region
      $region49: #{tpu_custom_call.1} parent=47 // pred_check
        %p1594 = pneg %p109
      $region50: #{tpu_custom_call.1} parent=47 // pred_check_branch
        %1596 = sbr.rel (%p1594) target = $region52
      $region51: #{tpu_custom_call.1} parent=47 // pred_region
        %s1597 = smul.u32 %s23, %s22
        %s1598 = smul.u32 16, %s1597
        %p1599 = scmp.lt.s32.totalorder %s21, 1
        %s1600 = scalar_select %p1599, %s21, 1
        %p1601 = scmp.lt.s32.totalorder %s1598, 31
        %s1602 = scalar_select %p1601, %s1598, 31
        %s1603 = smul.addr %s1600, 32
        %s1604 = sadd.s32 %s1602, %s1603
        %s1605 = smul.addr %s1604, 8
        %s1606 = scalar_lea.vmem %s2, %s1605
      $region52: #{tpu_custom_call.1} parent=47 // pred_fallthru
        _
    $region48: #{tpu_custom_call.1} parent=5 // pred_fallthru
      _
  $region6: #{tpu_custom_call.1} parent=0 // loop_footer
    %s12 = sadd.s32 1, %s8
  $region7: #{tpu_custom_call.1} parent=0 // loop_footer_branch
    %7 = sbr.rel target = $region3
  $region8: #{tpu_custom_call.1} parent=0 // loop_exit
    _

</llo_original>
